<compile_context>
chip_gen: v6e
topology: v6e:2x2x1
jax: 0.10.0
libtpu: 0.0.40
codegen_flags: <defaults>
</compile_context>

<pallas_src>
import jax
import jax.numpy as jnp
from jax.experimental import pallas as pl
from jax.experimental.pallas import tpu as pltpu

D = 1024          # hidden dim fixed by the module definition
EPS = 1e-12       # torch.nn.LayerNorm eps used by the module


def fc_kernel(x_ref, w_ref, gamma_ref, beta_ref, o_ref):
    # x_ref:     (TB, D)  batch tile (f32 or bf16)
    # w_ref:     (D, D)   Linear weight in native PyTorch (out, in) layout
    # gamma_ref: (1, D)   LayerNorm weight (f32)
    # beta_ref:  (1, D)   LayerNorm bias (frozen at 0 in the module, still applied)
    x = x_ref[...]
    w = w_ref[...]

    # Linear (no bias): y = x @ W^T. Contract the "in" dim of both operands so
    # the MXU consumes the (out, in) weight directly (no transpose op needed).
    # f32 accumulation regardless of the input dtype.
    y = jax.lax.dot_general(
        x, w,
        dimension_numbers=(((1,), (1,)), ((), ())),
        preferred_element_type=jnp.float32,
    )

    # LayerNorm over the last dim (biased variance, like torch.nn.LayerNorm), in f32.
    mean = jnp.mean(y, axis=-1, keepdims=True)
    centered = y - mean
    var = jnp.mean(centered * centered, axis=-1, keepdims=True)
    y_hat = centered * jax.lax.rsqrt(var + EPS)
    y_ln = y_hat * gamma_ref[...] + beta_ref[...]

    # Tanh activation (EUP).
    o_ref[...] = jnp.tanh(y_ln).astype(o_ref.dtype)


def fc_forward(x, weight, gamma, beta, *, tile_b=256, compute_dtype=None):
    """Forward pass of Fc.

    x:       (B, 1024)
    weight:  (1024, 1024) PyTorch Linear weight, shape (out_features, in_features)
    gamma:   (1024,) LayerNorm weight
    beta:    (1024,) LayerNorm bias
    tile_b:  batch tile. 128+ fills the v5e MXU, 256+ recommended for v6e/v7x.
    compute_dtype: optional dtype for the matmul operands (e.g. jnp.bfloat16 on
             v6e/v7x for the bf16-native MXU). Accumulation and LayerNorm/Tanh
             stay in f32 either way. None keeps the input dtype (f32 semantics).
    """
    B, Din = x.shape
    assert Din == D, f"expected feature dim {D}, got {Din}"
    assert weight.shape == (D, D)

    out_dtype = x.dtype

    if compute_dtype is not None:
        x_mm = x.astype(compute_dtype)
        w_mm = weight.astype(compute_dtype)
    else:
        x_mm = x
        w_mm = weight

    # Ragged / small batches: never over-pad a tiny batch, keep the tile a
    # multiple of 8 (sublane), and pad the last partial tile with zeros.
    tile_b = int(min(tile_b, pl.cdiv(B, 8) * 8))
    b_pad = int(pl.cdiv(B, tile_b) * tile_b)
    if b_pad != B:
        x_mm = jnp.pad(x_mm, ((0, b_pad - B), (0, 0)))

    gamma2 = gamma.reshape(1, D).astype(jnp.float32)
    beta2 = beta.reshape(1, D).astype(jnp.float32)

    grid = (b_pad // tile_b,)

    itemsize_in = jnp.dtype(x_mm.dtype).itemsize
    itemsize_out = jnp.dtype(out_dtype).itemsize
    cost = pl.CostEstimate(
        flops=2 * b_pad * D * D,
        transcendentals=b_pad * D,                      # tanh
        bytes_accessed=int(b_pad * D * itemsize_in      # x
                           + D * D * itemsize_in        # weight
                           + 2 * D * 4                  # gamma/beta
                           + b_pad * D * itemsize_out), # out
    )

    out = pl.pallas_call(
        fc_kernel,
        out_shape=jax.ShapeDtypeStruct((b_pad, D), out_dtype),
        grid_spec=pltpu.PrefetchScalarGridSpec(
            num_scalar_prefetch=0,
            grid=grid,
            in_specs=[
                # x batch tile: double-buffered (default) so DMA overlaps the matmul.
                pl.BlockSpec((tile_b, D), lambda i: (i, 0)),
                # Weight / gamma / beta: constant index_map -> single buffer.
                pl.BlockSpec((D, D), lambda i: (0, 0),
                             pipeline_mode=pl.Buffered(1)),
                pl.BlockSpec((1, D), lambda i: (0, 0),
                             pipeline_mode=pl.Buffered(1)),
                pl.BlockSpec((1, D), lambda i: (0, 0),
                             pipeline_mode=pl.Buffered(1)),
            ],
            out_specs=pl.BlockSpec((tile_b, D), lambda i: (i, 0)),
        ),
        compiler_params=pltpu.CompilerParams(
            dimension_semantics=("parallel",),   # batch tiles shard across TCs (v7x)
        ),
        cost_estimate=cost,
    )(x_mm, w_mm, gamma2, beta2)

    return out[:B] if b_pad != B else out


if __name__ == "__main__":
    key = jax.random.PRNGKey(0)
    k_x, k_w = jax.random.split(key)

    B = 8  # small batch for the example run

    # Input activations.
    x = jax.random.normal(k_x, (B, D), dtype=jnp.float32)

    # Parameter init matching the PyTorch module:
    #   classifier_fc.weight ~ Normal(0, std=0.001)  (weights_init_classifier)
    #   classifier_fc has no bias
    #   LayerNorm: weight = 1, bias = 0 (bias frozen but still applied)
    weight = 0.001 * jax.random.normal(k_w, (D, D), dtype=jnp.float32)
    gamma = jnp.ones((D,), dtype=jnp.float32)
    beta = jnp.zeros((D,), dtype=jnp.float32)

    # ---- f32 path (module semantics) ----
    out = fc_forward(x, weight, gamma, beta)
    out = jax.block_until_ready(out)

    y_ref = x @ weight.T
    mu = y_ref.mean(-1, keepdims=True)
    var = ((y_ref - mu) ** 2).mean(-1, keepdims=True)
    ref = jnp.tanh((y_ref - mu) / jnp.sqrt(var + EPS) * gamma + beta)
    assert out.shape == (B, D)
    assert jnp.allclose(out, ref, atol=1e-5, rtol=1e-5), "f32 mismatch vs reference"

    # ---- bf16-matmul path (recommended on v6e / v7x) ----
    out_bf16 = fc_forward(x, weight, gamma, beta, compute_dtype=jnp.bfloat16)
    out_bf16 = jax.block_until_ready(out_bf16)

    y_ref16 = jnp.dot(x.astype(jnp.bfloat16), weight.astype(jnp.bfloat16).T,
                      preferred_element_type=jnp.float32)
    mu16 = y_ref16.mean(-1, keepdims=True)
    var16 = ((y_ref16 - mu16) ** 2).mean(-1, keepdims=True)
    ref16 = jnp.tanh((y_ref16 - mu16) / jnp.sqrt(var16 + EPS) * gamma + beta)
    assert jnp.all(jnp.isfinite(out_bf16))
    assert jnp.allclose(out_bf16, ref16, atol=2e-2, rtol=2e-2), "bf16 mismatch vs reference"

    print("KERNEL_OK")
</pallas_src>

<mosaic_0001>
module attributes {stable_mosaic.version = 11 : i64} {
  func.func @fc_kernel(%arg0: i32, %arg1: memref<8x1024xf32, #tpu.memory_space<vmem>>, %arg2: memref<1024x1024xf32, #tpu.memory_space<vmem>>, %arg3: memref<1x1024xf32, #tpu.memory_space<vmem>>, %arg4: memref<1x1024xf32, #tpu.memory_space<vmem>>, %arg5: memref<8x1024xf32, #tpu.memory_space<vmem>>) attributes {dimension_semantics = [#tpu.dimension_semantics<parallel>], iteration_bounds = array<i64: 1>, scalar_prefetch = 0 : i64, scratch_operands = 0 : i64, tpu.core_type = #tpu.core_type<tc>, window_params = [{transform_indices = @transform_0, window_bounds = array<i64: 8, 1024>}, {pipeline_mode = #tpu.pipeline_mode<synchronous>, transform_indices = @transform_1, window_bounds = array<i64: 1024, 1024>}, {pipeline_mode = #tpu.pipeline_mode<synchronous>, transform_indices = @transform_2, window_bounds = array<i64: 1, 1024>}, {pipeline_mode = #tpu.pipeline_mode<synchronous>, transform_indices = @transform_3, window_bounds = array<i64: 1, 1024>}, {transform_indices = @transform_4, window_bounds = array<i64: 8, 1024>}]} {
    %c0 = arith.constant 0 : index
    %c0_0 = arith.constant 0 : index
    %0 = vector.load %arg1[%c0, %c0_0] : memref<8x1024xf32, #tpu.memory_space<vmem>>, vector<8x1024xf32>
    %c0_1 = arith.constant 0 : index
    %c0_2 = arith.constant 0 : index
    %1 = vector.load %arg2[%c0_1, %c0_2] : memref<1024x1024xf32, #tpu.memory_space<vmem>>, vector<1024x1024xf32>
    %cst = arith.constant dense<0.000000e+00> : vector<8x1024xf32>
    %2 = tpu.matmul %0, %1, %cst {dimension_numbers = #tpu.dot_dimension_numbers<[1], [1], [0], [0], [0, 0, 1, 0], [], []>} : vector<8x1024xf32>, vector<1024x1024xf32>, vector<8x1024xf32> -> vector<8x1024xf32>
    %cst_3 = arith.constant dense<0.000000e+00> : vector<8xf32>
    %3 = vector.multi_reduction <add>, %2, %cst_3 [1] : vector<8x1024xf32> to vector<8xf32>
    %4 = vector.shape_cast %3 : vector<8xf32> to vector<8x1xf32>
    %cst_4 = arith.constant 1.024000e+03 : f32
    %5 = vector.broadcast %cst_4 : f32 to vector<8x1xf32>
    %6 = arith.divf %4, %5 : vector<8x1xf32>
    %7 = vector.broadcast %6 : vector<8x1xf32> to vector<8x1024xf32>
    %8 = arith.subf %2, %7 : vector<8x1024xf32>
    %9 = arith.mulf %8, %8 : vector<8x1024xf32>
    %cst_5 = arith.constant dense<0.000000e+00> : vector<8xf32>
    %10 = vector.multi_reduction <add>, %9, %cst_5 [1] : vector<8x1024xf32> to vector<8xf32>
    %11 = vector.shape_cast %10 : vector<8xf32> to vector<8x1xf32>
    %cst_6 = arith.constant 1.024000e+03 : f32
    %12 = vector.broadcast %cst_6 : f32 to vector<8x1xf32>
    %13 = arith.divf %11, %12 : vector<8x1xf32>
    %cst_7 = arith.constant 9.99999996E-13 : f32
    %14 = vector.broadcast %cst_7 : f32 to vector<8x1xf32>
    %15 = arith.addf %13, %14 : vector<8x1xf32>
    %16 = math.rsqrt %15 : vector<8x1xf32>
    %17 = vector.broadcast %16 : vector<8x1xf32> to vector<8x1024xf32>
    %18 = arith.mulf %8, %17 : vector<8x1024xf32>
    %c0_8 = arith.constant 0 : index
    %c0_9 = arith.constant 0 : index
    %19 = vector.load %arg3[%c0_8, %c0_9] : memref<1x1024xf32, #tpu.memory_space<vmem>>, vector<1x1024xf32>
    %20 = vector.broadcast %19 : vector<1x1024xf32> to vector<8x1024xf32>
    %21 = arith.mulf %18, %20 : vector<8x1024xf32>
    %c0_10 = arith.constant 0 : index
    %c0_11 = arith.constant 0 : index
    %22 = vector.load %arg4[%c0_10, %c0_11] : memref<1x1024xf32, #tpu.memory_space<vmem>>, vector<1x1024xf32>
    %23 = vector.broadcast %22 : vector<1x1024xf32> to vector<8x1024xf32>
    %24 = arith.addf %21, %23 : vector<8x1024xf32>
    %25 = math.tanh %24 : vector<8x1024xf32>
    %c0_12 = arith.constant 0 : index
    %c0_13 = arith.constant 0 : index
    %26 = vector.load %arg5[%c0_12, %c0_13] : memref<8x1024xf32, #tpu.memory_space<vmem>>, vector<8x1024xf32>
    tpu.vector_store %arg5[%c0_12, %c0_13], %25 {strides = array<i32>} : memref<8x1024xf32, #tpu.memory_space<vmem>>, vector<8x1024xf32>,
    return
  }
  func.func @transform_0(%arg0: i32) -> (i32, i32) {
    %c0_i32 = arith.constant 0 : i32
    %c0_i32_0 = arith.constant 0 : i32
    return %arg0, %c0_i32 : i32, i32
  }
  func.func @transform_1(%arg0: i32) -> (i32, i32) {
    %c0_i32 = arith.constant 0 : i32
    %c0_i32_0 = arith.constant 0 : i32
    %c0_i32_1 = arith.constant 0 : i32
    return %c0_i32, %c0_i32_0 : i32, i32
  }
  func.func @transform_2(%arg0: i32) -> (i32, i32) {
    %c0_i32 = arith.constant 0 : i32
    %c0_i32_0 = arith.constant 0 : i32
    %c0_i32_1 = arith.constant 0 : i32
    return %c0_i32, %c0_i32_0 : i32, i32
  }
  func.func @transform_3(%arg0: i32) -> (i32, i32) {
    %c0_i32 = arith.constant 0 : i32
    %c0_i32_0 = arith.constant 0 : i32
    %c0_i32_1 = arith.constant 0 : i32
    return %c0_i32, %c0_i32_0 : i32, i32
  }
  func.func @transform_4(%arg0: i32) -> (i32, i32) {
    %c0_i32 = arith.constant 0 : i32
    %c0_i32_0 = arith.constant 0 : i32
    return %arg0, %c0_i32 : i32, i32
  }
}

</mosaic_0001>

<llo_original>
// kernel: tpu_custom_call.1
$region0: #{tpu_custom_call.1}
  #allocation0 [shape = 'u32[]', space=smem, size = 0x4, offset = 0x4, fixed_abs, tag = 'smem constant byte address 0x4 - core index']
  #allocation1 [shape = 'u32[144,128]{1,0:T(1,128)}', space=vmem, size = 0x12000, scoped, tag = 'internal scratch']
  %s0 = inlined_call_operand.hbm [shape: f32[8,1024], index: 0, kind: input, shape index: {}]
  %s1 = inlined_call_operand.hbm [shape: f32[1024,1024], index: 1, kind: input, shape index: {}]
  %s2 = inlined_call_operand.hbm [shape: f32[1,1024], index: 2, kind: input, shape index: {}]
  %s3 = inlined_call_operand.hbm [shape: f32[1,1024], index: 3, kind: input, shape index: {}]
  %s4 = inlined_call_operand.hbm [shape: f32[8,1024], index: 4, kind: output, shape index: {}]
  %s5 = sld [smem:[#allocation0]]
  $region42: #{tpu_custom_call.1} parent=0
    _
  %s7 = ssub.s32 1, %s5
  %s8 = scalar_select 0, %s7, %s5
  $region1: #{tpu_custom_call.1} parent=0
    #allocation2 [shape = 'u8[32768]{0}', space=vmem, size = 0x8000, scoped, tag = 'input window, operand 0, single buffered']
    #allocation3 [shape = 's32[1]{0}', space=sflag, size = 0x4, scoped, tag = 'scoped memory for tpu_custom_call.1']
    #allocation4 [shape = 's32[1]{0}', space=sflag, size = 0x4, scoped, tag = 'scoped memory for tpu_custom_call.1']
    #allocation5 [shape = 'u8[4194304]{0}', space=vmem, size = 0x400000, scoped, tag = 'input window, operand 1, single buffered']
    #allocation6 [shape = 's32[1]{0}', space=sflag, size = 0x4, scoped, tag = 'scoped memory for tpu_custom_call.1']
    #allocation7 [shape = 'u8[4096]{0}', space=vmem, size = 0x1000, scoped, tag = 'input window, operand 2, single buffered']
    #allocation8 [shape = 'u8[4096]{0}', space=vmem, size = 0x1000, scoped, tag = 'input window, operand 3, single buffered']
    #allocation9 [shape = 's32[1]{0}', space=sflag, size = 0x4, scoped, tag = 'scoped memory for tpu_custom_call.1']
    #allocation10 [shape = 'u8[32768]{0}', space=vmem, size = 0x8000, scoped, tag = 'output window, operand 0, single buffered']
    %9 = vsyncpa [#allocation3], 0
    %10 = vsyncpa [#allocation6], 0
    %11 = vsyncpa [#allocation9], 0
    %12 = vsyncpa [#allocation4], 0
    // Predicated region
    $region2: #{tpu_custom_call.1} parent=1 // pred_check
      _
    $region3: #{tpu_custom_call.1} parent=1 // pred_check_branch
      %14 = sbr.rel (0) target = $region5
    $region4: #{tpu_custom_call.1} parent=1 // pred_region
      %s16 = ssub.s32 1024, 1024
      %17 = vsyncadd [#allocation3], %s16
      %s19 = sshll.u32 [#allocation2], 4
      %s20 = int_to_ptr.vmem [resolvable:$true] %s19
      %22 = dma.hbm_to_vmem [thread:$0]  %s0, 1024, %s20, [#allocation3]
    $region5: #{tpu_custom_call.1} parent=1 // pred_fallthru
      _
    // Predicated region
    $region6: #{tpu_custom_call.1} parent=1 // pred_check
      _
    $region7: #{tpu_custom_call.1} parent=1 // pred_check_branch
      %24 = sbr.rel (0) target = $region9
    $region8: #{tpu_custom_call.1} parent=1 // pred_region
      %s26 = ssub.s32 131072, 131072
      %27 = vsyncadd [#allocation6], %s26
      %s28 = sshll.u32 [#allocation5], 4
      %s29 = int_to_ptr.vmem [resolvable:$true] %s28
      %34 = dma.hbm_to_vmem [thread:$0]  %s1, 131072, %s29, [#allocation6], 1024, 1024, 64
    $region9: #{tpu_custom_call.1} parent=1 // pred_fallthru
      _
    // Predicated region
    $region10: #{tpu_custom_call.1} parent=1 // pred_check
      _
    $region11: #{tpu_custom_call.1} parent=1 // pred_check_branch
      %36 = sbr.rel (0) target = $region13
    $region12: #{tpu_custom_call.1} parent=1 // pred_region
      %s38 = ssub.s32 128, 128
      %39 = vsyncadd [#allocation6], %s38
      %s41 = sshll.u32 [#allocation7], 4
      %s42 = int_to_ptr.vmem [resolvable:$true] %s41
      %44 = dma.hbm_to_vmem [thread:$0]  %s2, 128, %s42, [#allocation6]
    $region13: #{tpu_custom_call.1} parent=1 // pred_fallthru
      _
    // Predicated region
    $region14: #{tpu_custom_call.1} parent=1 // pred_check
      _
    $region15: #{tpu_custom_call.1} parent=1 // pred_check_branch
      %46 = sbr.rel (0) target = $region17
    $region16: #{tpu_custom_call.1} parent=1 // pred_region
      %s48 = ssub.s32 128, 128
      %49 = vsyncadd [#allocation9], %s48
      %s51 = sshll.u32 [#allocation8], 4
      %s52 = int_to_ptr.vmem [resolvable:$true] %s51
      %54 = dma.hbm_to_vmem [thread:$0]  %s3, 128, %s52, [#allocation9]
    $region17: #{tpu_custom_call.1} parent=1 // pred_fallthru
      _
    // Predicated region
    $region18: #{tpu_custom_call.1} parent=1 // pred_check
      _
    $region19: #{tpu_custom_call.1} parent=1 // pred_check_branch
      %56 = sbr.rel (0) target = $region21
    $region20: #{tpu_custom_call.1} parent=1 // pred_region
      %57 = dma.done [#allocation3], 1024
    $region21: #{tpu_custom_call.1} parent=1 // pred_fallthru
      _
    // Predicated region
    $region22: #{tpu_custom_call.1} parent=1 // pred_check
      _
    $region23: #{tpu_custom_call.1} parent=1 // pred_check_branch
      %59 = sbr.rel (0) target = $region25
    $region24: #{tpu_custom_call.1} parent=1 // pred_region
      %60 = dma.done [#allocation6], 131072
    $region25: #{tpu_custom_call.1} parent=1 // pred_fallthru
      _
    // Predicated region
    $region26: #{tpu_custom_call.1} parent=1 // pred_check
      _
    $region27: #{tpu_custom_call.1} parent=1 // pred_check_branch
      %62 = sbr.rel (0) target = $region29
    $region28: #{tpu_custom_call.1} parent=1 // pred_region
      %63 = dma.done [#allocation6], 128
    $region29: #{tpu_custom_call.1} parent=1 // pred_fallthru
      _
    // Predicated region
    $region30: #{tpu_custom_call.1} parent=1 // pred_check
      _
    $region31: #{tpu_custom_call.1} parent=1 // pred_check_branch
      %65 = sbr.rel (0) target = $region33
    $region32: #{tpu_custom_call.1} parent=1 // pred_region
      %66 = dma.done [#allocation9], 128
    $region33: #{tpu_custom_call.1} parent=1 // pred_fallthru
      _
    %v67 = vld [vmem:[#allocation2] sm:$0xff]
    %v68 = vld [vmem:[#allocation2 + $0x8] sm:$0xff]
    %v69 = vld [vmem:[#allocation2 + $0x10] sm:$0xff]
    %v70 = vld [vmem:[#allocation2 + $0x18] sm:$0xff]
    %v71 = vld [vmem:[#allocation2 + $0x20] sm:$0xff]
    %v72 = vld [vmem:[#allocation2 + $0x28] sm:$0xff]
    %v73 = vld [vmem:[#allocation2 + $0x30] sm:$0xff]
    %v74 = vld [vmem:[#allocation2 + $0x38] sm:$0xff]
    %v75 = vld [vmem:[#allocation5] sm:$0xff]
    %v76 = vld [vmem:[#allocation5 + $0x8] sm:$0xff]
    %v77 = vld [vmem:[#allocation5 + $0x10] sm:$0xff]
    %v78 = vld [vmem:[#allocation5 + $0x18] sm:$0xff]
    %v79 = vld [vmem:[#allocation5 + $0x20] sm:$0xff]
    %v80 = vld [vmem:[#allocation5 + $0x28] sm:$0xff]
    %v81 = vld [vmem:[#allocation5 + $0x30] sm:$0xff]
    %v82 = vld [vmem:[#allocation5 + $0x38] sm:$0xff]
    %v83 = vld [vmem:[#allocation5 + $0x40] sm:$0xff]
    %v84 = vld [vmem:[#allocation5 + $0x48] sm:$0xff]
    %v85 = vld [vmem:[#allocation5 + $0x50] sm:$0xff]
    %v86 = vld [vmem:[#allocation5 + $0x58] sm:$0xff]
    %v87 = vld [vmem:[#allocation5 + $0x60] sm:$0xff]
    %v88 = vld [vmem:[#allocation5 + $0x68] sm:$0xff]
    %v89 = vld [vmem:[#allocation5 + $0x70] sm:$0xff]
    %v90 = vld [vmem:[#allocation5 + $0x78] sm:$0xff]
    %v91 = vld [vmem:[#allocation5 + $0x80] sm:$0xff]
    %v92 = vld [vmem:[#allocation5 + $0x88] sm:$0xff]
    %v93 = vld [vmem:[#allocation5 + $0x90] sm:$0xff]
    %v94 = vld [vmem:[#allocation5 + $0x98] sm:$0xff]
    %v95 = vld [vmem:[#allocation5 + $0xa0] sm:$0xff]
    %v96 = vld [vmem:[#allocation5 + $0xa8] sm:$0xff]
    %v97 = vld [vmem:[#allocation5 + $0xb0] sm:$0xff]
    %v98 = vld [vmem:[#allocation5 + $0xb8] sm:$0xff]
    %v99 = vld [vmem:[#allocation5 + $0xc0] sm:$0xff]
    %v100 = vld [vmem:[#allocation5 + $0xc8] sm:$0xff]
    %v101 = vld [vmem:[#allocation5 + $0xd0] sm:$0xff]
    %v102 = vld [vmem:[#allocation5 + $0xd8] sm:$0xff]
    %v103 = vld [vmem:[#allocation5 + $0xe0] sm:$0xff]
    %v104 = vld [vmem:[#allocation5 + $0xe8] sm:$0xff]
    %v105 = vld [vmem:[#allocation5 + $0xf0] sm:$0xff]
    %v106 = vld [vmem:[#allocation5 + $0xf8] sm:$0xff]
    %v107 = vld [vmem:[#allocation5 + $0x100] sm:$0xff]
    %v108 = vld [vmem:[#allocation5 + $0x108] sm:$0xff]
    %v109 = vld [vmem:[#allocation5 + $0x110] sm:$0xff]
    %v110 = vld [vmem:[#allocation5 + $0x118] sm:$0xff]
    %v111 = vld [vmem:[#allocation5 + $0x120] sm:$0xff]
    %v112 = vld [vmem:[#allocation5 + $0x128] sm:$0xff]
    %v113 = vld [vmem:[#allocation5 + $0x130] sm:$0xff]
    %v114 = vld [vmem:[#allocation5 + $0x138] sm:$0xff]
    %v115 = vld [vmem:[#allocation5 + $0x140] sm:$0xff]
    %v116 = vld [vmem:[#allocation5 + $0x148] sm:$0xff]
    %v117 = vld [vmem:[#allocation5 + $0x150] sm:$0xff]
    %v118 = vld [vmem:[#allocation5 + $0x158] sm:$0xff]
    %v119 = vld [vmem:[#allocation5 + $0x160] sm:$0xff]
    %v120 = vld [vmem:[#allocation5 + $0x168] sm:$0xff]
    %v121 = vld [vmem:[#allocation5 + $0x170] sm:$0xff]
    %v122 = vld [vmem:[#allocation5 + $0x178] sm:$0xff]
    %v123 = vld [vmem:[#allocation5 + $0x180] sm:$0xff]
    %v124 = vld [vmem:[#allocation5 + $0x188] sm:$0xff]
    %v125 = vld [vmem:[#allocation5 + $0x190] sm:$0xff]
    %v126 = vld [vmem:[#allocation5 + $0x198] sm:$0xff]
    %v127 = vld [vmem:[#allocation5 + $0x1a0] sm:$0xff]
    %v128 = vld [vmem:[#allocation5 + $0x1a8] sm:$0xff]
    %v129 = vld [vmem:[#allocation5 + $0x1b0] sm:$0xff]
    %v130 = vld [vmem:[#allocation5 + $0x1b8] sm:$0xff]
    %v131 = vld [vmem:[#allocation5 + $0x1c0] sm:$0xff]
    %v132 = vld [vmem:[#allocation5 + $0x1c8] sm:$0xff]
    %v133 = vld [vmem:[#allocation5 + $0x1d0] sm:$0xff]
    %v134 = vld [vmem:[#allocation5 + $0x1d8] sm:$0xff]
    %v135 = vld [vmem:[#allocation5 + $0x1e0] sm:$0xff]
    %v136 = vld [vmem:[#allocation5 + $0x1e8] sm:$0xff]
    %v137 = vld [vmem:[#allocation5 + $0x1f0] sm:$0xff]
    %v138 = vld [vmem:[#allocation5 + $0x1f8] sm:$0xff]
    %v139 = vld [vmem:[#allocation5 + $0x200] sm:$0xff]
    %v140 = vld [vmem:[#allocation5 + $0x208] sm:$0xff]
    %v141 = vld [vmem:[#allocation5 + $0x210] sm:$0xff]
    %v142 = vld [vmem:[#allocation5 + $0x218] sm:$0xff]
    %v143 = vld [vmem:[#allocation5 + $0x220] sm:$0xff]
    %v144 = vld [vmem:[#allocation5 + $0x228] sm:$0xff]
    %v145 = vld [vmem:[#allocation5 + $0x230] sm:$0xff]
    %v146 = vld [vmem:[#allocation5 + $0x238] sm:$0xff]
    %v147 = vld [vmem:[#allocation5 + $0x240] sm:$0xff]
    %v148 = vld [vmem:[#allocation5 + $0x248] sm:$0xff]
    %v149 = vld [vmem:[#allocation5 + $0x250] sm:$0xff]
    %v150 = vld [vmem:[#allocation5 + $0x258] sm:$0xff]
    %v151 = vld [vmem:[#allocation5 + $0x260] sm:$0xff]
    %v152 = vld [vmem:[#allocation5 + $0x268] sm:$0xff]
    %v153 = vld [vmem:[#allocation5 + $0x270] sm:$0xff]
    %v154 = vld [vmem:[#allocation5 + $0x278] sm:$0xff]
    %v155 = vld [vmem:[#allocation5 + $0x280] sm:$0xff]
    %v156 = vld [vmem:[#allocation5 + $0x288] sm:$0xff]
    %v157 = vld [vmem:[#allocation5 + $0x290] sm:$0xff]
    %v158 = vld [vmem:[#allocation5 + $0x298] sm:$0xff]
    %v159 = vld [vmem:[#allocation5 + $0x2a0] sm:$0xff]
    %v160 = vld [vmem:[#allocation5 + $0x2a8] sm:$0xff]
    %v161 = vld [vmem:[#allocation5 + $0x2b0] sm:$0xff]
    %v162 = vld [vmem:[#allocation5 + $0x2b8] sm:$0xff]
    %v163 = vld [vmem:[#allocation5 + $0x2c0] sm:$0xff]
    %v164 = vld [vmem:[#allocation5 + $0x2c8] sm:$0xff]
    %v165 = vld [vmem:[#allocation5 + $0x2d0] sm:$0xff]
    %v166 = vld [vmem:[#allocation5 + $0x2d8] sm:$0xff]
    %v167 = vld [vmem:[#allocation5 + $0x2e0] sm:$0xff]
    %v168 = vld [vmem:[#allocation5 + $0x2e8] sm:$0xff]
    %v169 = vld [vmem:[#allocation5 + $0x2f0] sm:$0xff]
    %v170 = vld [vmem:[#allocation5 + $0x2f8] sm:$0xff]
    %v171 = vld [vmem:[#allocation5 + $0x300] sm:$0xff]
    %v172 = vld [vmem:[#allocation5 + $0x308] sm:$0xff]
    %v173 = vld [vmem:[#allocation5 + $0x310] sm:$0xff]
    %v174 = vld [vmem:[#allocation5 + $0x318] sm:$0xff]
    %v175 = vld [vmem:[#allocation5 + $0x320] sm:$0xff]
    %v176 = vld [vmem:[#allocation5 + $0x328] sm:$0xff]
    %v177 = vld [vmem:[#allocation5 + $0x330] sm:$0xff]
    %v178 = vld [vmem:[#allocation5 + $0x338] sm:$0xff]
    %v179 = vld [vmem:[#allocation5 + $0x340] sm:$0xff]
    %v180 = vld [vmem:[#allocation5 + $0x348] sm:$0xff]
    %v181 = vld [vmem:[#allocation5 + $0x350] sm:$0xff]
    %v182 = vld [vmem:[#allocation5 + $0x358] sm:$0xff]
    %v183 = vld [vmem:[#allocation5 + $0x360] sm:$0xff]
    %v184 = vld [vmem:[#allocation5 + $0x368] sm:$0xff]
    %v185 = vld [vmem:[#allocation5 + $0x370] sm:$0xff]
    %v186 = vld [vmem:[#allocation5 + $0x378] sm:$0xff]
    %v187 = vld [vmem:[#allocation5 + $0x380] sm:$0xff]
    %v188 = vld [vmem:[#allocation5 + $0x388] sm:$0xff]
    %v189 = vld [vmem:[#allocation5 + $0x390] sm:$0xff]
    %v190 = vld [vmem:[#allocation5 + $0x398] sm:$0xff]
    %v191 = vld [vmem:[#allocation5 + $0x3a0] sm:$0xff]
    %v192 = vld [vmem:[#allocation5 + $0x3a8] sm:$0xff]
    %v193 = vld [vmem:[#allocation5 + $0x3b0] sm:$0xff]
    %v194 = vld [vmem:[#allocation5 + $0x3b8] sm:$0xff]
    %v195 = vld [vmem:[#allocation5 + $0x3c0] sm:$0xff]
    %v196 = vld [vmem:[#allocation5 + $0x3c8] sm:$0xff]
    %v197 = vld [vmem:[#allocation5 + $0x3d0] sm:$0xff]
    %v198 = vld [vmem:[#allocation5 + $0x3d8] sm:$0xff]
    %v199 = vld [vmem:[#allocation5 + $0x3e0] sm:$0xff]
    %v200 = vld [vmem:[#allocation5 + $0x3e8] sm:$0xff]
    %v201 = vld [vmem:[#allocation5 + $0x3f0] sm:$0xff]
    %v202 = vld [vmem:[#allocation5 + $0x3f8] sm:$0xff]
    %v203 = vld [vmem:[#allocation5 + $0x400] sm:$0xff]
    %v204 = vld [vmem:[#allocation5 + $0x408] sm:$0xff]
    %v205 = vld [vmem:[#allocation5 + $0x410] sm:$0xff]
    %v206 = vld [vmem:[#allocation5 + $0x418] sm:$0xff]
    %v207 = vld [vmem:[#allocation5 + $0x420] sm:$0xff]
    %v208 = vld [vmem:[#allocation5 + $0x428] sm:$0xff]
    %v209 = vld [vmem:[#allocation5 + $0x430] sm:$0xff]
    %v210 = vld [vmem:[#allocation5 + $0x438] sm:$0xff]
    %v211 = vld [vmem:[#allocation5 + $0x440] sm:$0xff]
    %v212 = vld [vmem:[#allocation5 + $0x448] sm:$0xff]
    %v213 = vld [vmem:[#allocation5 + $0x450] sm:$0xff]
    %v214 = vld [vmem:[#allocation5 + $0x458] sm:$0xff]
    %v215 = vld [vmem:[#allocation5 + $0x460] sm:$0xff]
    %v216 = vld [vmem:[#allocation5 + $0x468] sm:$0xff]
    %v217 = vld [vmem:[#allocation5 + $0x470] sm:$0xff]
    %v218 = vld [vmem:[#allocation5 + $0x478] sm:$0xff]
    %v219 = vld [vmem:[#allocation5 + $0x480] sm:$0xff]
    %v220 = vld [vmem:[#allocation5 + $0x488] sm:$0xff]
    %v221 = vld [vmem:[#allocation5 + $0x490] sm:$0xff]
    %v222 = vld [vmem:[#allocation5 + $0x498] sm:$0xff]
    %v223 = vld [vmem:[#allocation5 + $0x4a0] sm:$0xff]
    %v224 = vld [vmem:[#allocation5 + $0x4a8] sm:$0xff]
    %v225 = vld [vmem:[#allocation5 + $0x4b0] sm:$0xff]
    %v226 = vld [vmem:[#allocation5 + $0x4b8] sm:$0xff]
    %v227 = vld [vmem:[#allocation5 + $0x4c0] sm:$0xff]
    %v228 = vld [vmem:[#allocation5 + $0x4c8] sm:$0xff]
    %v229 = vld [vmem:[#allocation5 + $0x4d0] sm:$0xff]
    %v230 = vld [vmem:[#allocation5 + $0x4d8] sm:$0xff]
    %v231 = vld [vmem:[#allocation5 + $0x4e0] sm:$0xff]
    %v232 = vld [vmem:[#allocation5 + $0x4e8] sm:$0xff]
    %v233 = vld [vmem:[#allocation5 + $0x4f0] sm:$0xff]
    %v234 = vld [vmem:[#allocation5 + $0x4f8] sm:$0xff]
    %v235 = vld [vmem:[#allocation5 + $0x500] sm:$0xff]
    %v236 = vld [vmem:[#allocation5 + $0x508] sm:$0xff]
    %v237 = vld [vmem:[#allocation5 + $0x510] sm:$0xff]
    %v238 = vld [vmem:[#allocation5 + $0x518] sm:$0xff]
    %v239 = vld [vmem:[#allocation5 + $0x520] sm:$0xff]
    %v240 = vld [vmem:[#allocation5 + $0x528] sm:$0xff]
    %v241 = vld [vmem:[#allocation5 + $0x530] sm:$0xff]
    %v242 = vld [vmem:[#allocation5 + $0x538] sm:$0xff]
    %v243 = vld [vmem:[#allocation5 + $0x540] sm:$0xff]
    %v244 = vld [vmem:[#allocation5 + $0x548] sm:$0xff]
    %v245 = vld [vmem:[#allocation5 + $0x550] sm:$0xff]
    %v246 = vld [vmem:[#allocation5 + $0x558] sm:$0xff]
    %v247 = vld [vmem:[#allocation5 + $0x560] sm:$0xff]
    %v248 = vld [vmem:[#allocation5 + $0x568] sm:$0xff]
    %v249 = vld [vmem:[#allocation5 + $0x570] sm:$0xff]
    %v250 = vld [vmem:[#allocation5 + $0x578] sm:$0xff]
    %v251 = vld [vmem:[#allocation5 + $0x580] sm:$0xff]
    %v252 = vld [vmem:[#allocation5 + $0x588] sm:$0xff]
    %v253 = vld [vmem:[#allocation5 + $0x590] sm:$0xff]
    %v254 = vld [vmem:[#allocation5 + $0x598] sm:$0xff]
    %v255 = vld [vmem:[#allocation5 + $0x5a0] sm:$0xff]
    %v256 = vld [vmem:[#allocation5 + $0x5a8] sm:$0xff]
    %v257 = vld [vmem:[#allocation5 + $0x5b0] sm:$0xff]
    %v258 = vld [vmem:[#allocation5 + $0x5b8] sm:$0xff]
    %v259 = vld [vmem:[#allocation5 + $0x5c0] sm:$0xff]
    %v260 = vld [vmem:[#allocation5 + $0x5c8] sm:$0xff]
    %v261 = vld [vmem:[#allocation5 + $0x5d0] sm:$0xff]
    %v262 = vld [vmem:[#allocation5 + $0x5d8] sm:$0xff]
    %v263 = vld [vmem:[#allocation5 + $0x5e0] sm:$0xff]
    %v264 = vld [vmem:[#allocation5 + $0x5e8] sm:$0xff]
    %v265 = vld [vmem:[#allocation5 + $0x5f0] sm:$0xff]
    %v266 = vld [vmem:[#allocation5 + $0x5f8] sm:$0xff]
    %v267 = vld [vmem:[#allocation5 + $0x600] sm:$0xff]
    %v268 = vld [vmem:[#allocation5 + $0x608] sm:$0xff]
    %v269 = vld [vmem:[#allocation5 + $0x610] sm:$0xff]
    %v270 = vld [vmem:[#allocation5 + $0x618] sm:$0xff]
    %v271 = vld [vmem:[#allocation5 + $0x620] sm:$0xff]
    %v272 = vld [vmem:[#allocation5 + $0x628] sm:$0xff]
    %v273 = vld [vmem:[#allocation5 + $0x630] sm:$0xff]
    %v274 = vld [vmem:[#allocation5 + $0x638] sm:$0xff]
    %v275 = vld [vmem:[#allocation5 + $0x640] sm:$0xff]
    %v276 = vld [vmem:[#allocation5 + $0x648] sm:$0xff]
    %v277 = vld [vmem:[#allocation5 + $0x650] sm:$0xff]
    %v278 = vld [vmem:[#allocation5 + $0x658] sm:$0xff]
    %v279 = vld [vmem:[#allocation5 + $0x660] sm:$0xff]
    %v280 = vld [vmem:[#allocation5 + $0x668] sm:$0xff]
    %v281 = vld [vmem:[#allocation5 + $0x670] sm:$0xff]
    %v282 = vld [vmem:[#allocation5 + $0x678] sm:$0xff]
    %v283 = vld [vmem:[#allocation5 + $0x680] sm:$0xff]
    %v284 = vld [vmem:[#allocation5 + $0x688] sm:$0xff]
    %v285 = vld [vmem:[#allocation5 + $0x690] sm:$0xff]
    %v286 = vld [vmem:[#allocation5 + $0x698] sm:$0xff]
    %v287 = vld [vmem:[#allocation5 + $0x6a0] sm:$0xff]
    %v288 = vld [vmem:[#allocation5 + $0x6a8] sm:$0xff]
    %v289 = vld [vmem:[#allocation5 + $0x6b0] sm:$0xff]
    %v290 = vld [vmem:[#allocation5 + $0x6b8] sm:$0xff]
    %v291 = vld [vmem:[#allocation5 + $0x6c0] sm:$0xff]
    %v292 = vld [vmem:[#allocation5 + $0x6c8] sm:$0xff]
    %v293 = vld [vmem:[#allocation5 + $0x6d0] sm:$0xff]
    %v294 = vld [vmem:[#allocation5 + $0x6d8] sm:$0xff]
    %v295 = vld [vmem:[#allocation5 + $0x6e0] sm:$0xff]
    %v296 = vld [vmem:[#allocation5 + $0x6e8] sm:$0xff]
    %v297 = vld [vmem:[#allocation5 + $0x6f0] sm:$0xff]
    %v298 = vld [vmem:[#allocation5 + $0x6f8] sm:$0xff]
    %v299 = vld [vmem:[#allocation5 + $0x700] sm:$0xff]
    %v300 = vld [vmem:[#allocation5 + $0x708] sm:$0xff]
    %v301 = vld [vmem:[#allocation5 + $0x710] sm:$0xff]
    %v302 = vld [vmem:[#allocation5 + $0x718] sm:$0xff]
    %v303 = vld [vmem:[#allocation5 + $0x720] sm:$0xff]
    %v304 = vld [vmem:[#allocation5 + $0x728] sm:$0xff]
    %v305 = vld [vmem:[#allocation5 + $0x730] sm:$0xff]
    %v306 = vld [vmem:[#allocation5 + $0x738] sm:$0xff]
    %v307 = vld [vmem:[#allocation5 + $0x740] sm:$0xff]
    %v308 = vld [vmem:[#allocation5 + $0x748] sm:$0xff]
    %v309 = vld [vmem:[#allocation5 + $0x750] sm:$0xff]
    %v310 = vld [vmem:[#allocation5 + $0x758] sm:$0xff]
    %v311 = vld [vmem:[#allocation5 + $0x760] sm:$0xff]
    %v312 = vld [vmem:[#allocation5 + $0x768] sm:$0xff]
    %v313 = vld [vmem:[#allocation5 + $0x770] sm:$0xff]
    %v314 = vld [vmem:[#allocation5 + $0x778] sm:$0xff]
    %v315 = vld [vmem:[#allocation5 + $0x780] sm:$0xff]
    %v316 = vld [vmem:[#allocation5 + $0x788] sm:$0xff]
    %v317 = vld [vmem:[#allocation5 + $0x790] sm:$0xff]
    %v318 = vld [vmem:[#allocation5 + $0x798] sm:$0xff]
    %v319 = vld [vmem:[#allocation5 + $0x7a0] sm:$0xff]
    %v320 = vld [vmem:[#allocation5 + $0x7a8] sm:$0xff]
    %v321 = vld [vmem:[#allocation5 + $0x7b0] sm:$0xff]
    %v322 = vld [vmem:[#allocation5 + $0x7b8] sm:$0xff]
    %v323 = vld [vmem:[#allocation5 + $0x7c0] sm:$0xff]
    %v324 = vld [vmem:[#allocation5 + $0x7c8] sm:$0xff]
    %v325 = vld [vmem:[#allocation5 + $0x7d0] sm:$0xff]
    %v326 = vld [vmem:[#allocation5 + $0x7d8] sm:$0xff]
    %v327 = vld [vmem:[#allocation5 + $0x7e0] sm:$0xff]
    %v328 = vld [vmem:[#allocation5 + $0x7e8] sm:$0xff]
    %v329 = vld [vmem:[#allocation5 + $0x7f0] sm:$0xff]
    %v330 = vld [vmem:[#allocation5 + $0x7f8] sm:$0xff]
    %v331 = vld [vmem:[#allocation5 + $0x800] sm:$0xff]
    %v332 = vld [vmem:[#allocation5 + $0x808] sm:$0xff]
    %v333 = vld [vmem:[#allocation5 + $0x810] sm:$0xff]
    %v334 = vld [vmem:[#allocation5 + $0x818] sm:$0xff]
    %v335 = vld [vmem:[#allocation5 + $0x820] sm:$0xff]
    %v336 = vld [vmem:[#allocation5 + $0x828] sm:$0xff]
    %v337 = vld [vmem:[#allocation5 + $0x830] sm:$0xff]
    %v338 = vld [vmem:[#allocation5 + $0x838] sm:$0xff]
    %v339 = vld [vmem:[#allocation5 + $0x840] sm:$0xff]
    %v340 = vld [vmem:[#allocation5 + $0x848] sm:$0xff]
    %v341 = vld [vmem:[#allocation5 + $0x850] sm:$0xff]
    %v342 = vld [vmem:[#allocation5 + $0x858] sm:$0xff]
    %v343 = vld [vmem:[#allocation5 + $0x860] sm:$0xff]
    %v344 = vld [vmem:[#allocation5 + $0x868] sm:$0xff]
    %v345 = vld [vmem:[#allocation5 + $0x870] sm:$0xff]
    %v346 = vld [vmem:[#allocation5 + $0x878] sm:$0xff]
    %v347 = vld [vmem:[#allocation5 + $0x880] sm:$0xff]
    %v348 = vld [vmem:[#allocation5 + $0x888] sm:$0xff]
    %v349 = vld [vmem:[#allocation5 + $0x890] sm:$0xff]
    %v350 = vld [vmem:[#allocation5 + $0x898] sm:$0xff]
    %v351 = vld [vmem:[#allocation5 + $0x8a0] sm:$0xff]
    %v352 = vld [vmem:[#allocation5 + $0x8a8] sm:$0xff]
    %v353 = vld [vmem:[#allocation5 + $0x8b0] sm:$0xff]
    %v354 = vld [vmem:[#allocation5 + $0x8b8] sm:$0xff]
    %v355 = vld [vmem:[#allocation5 + $0x8c0] sm:$0xff]
    %v356 = vld [vmem:[#allocation5 + $0x8c8] sm:$0xff]
    %v357 = vld [vmem:[#allocation5 + $0x8d0] sm:$0xff]
    %v358 = vld [vmem:[#allocation5 + $0x8d8] sm:$0xff]
    %v359 = vld [vmem:[#allocation5 + $0x8e0] sm:$0xff]
    %v360 = vld [vmem:[#allocation5 + $0x8e8] sm:$0xff]
    %v361 = vld [vmem:[#allocation5 + $0x8f0] sm:$0xff]
    %v362 = vld [vmem:[#allocation5 + $0x8f8] sm:$0xff]
    %v363 = vld [vmem:[#allocation5 + $0x900] sm:$0xff]
    %v364 = vld [vmem:[#allocation5 + $0x908] sm:$0xff]
    %v365 = vld [vmem:[#allocation5 + $0x910] sm:$0xff]
    %v366 = vld [vmem:[#allocation5 + $0x918] sm:$0xff]
    %v367 = vld [vmem:[#allocation5 + $0x920] sm:$0xff]
    %v368 = vld [vmem:[#allocation5 + $0x928] sm:$0xff]
    %v369 = vld [vmem:[#allocation5 + $0x930] sm:$0xff]
    %v370 = vld [vmem:[#allocation5 + $0x938] sm:$0xff]
    %v371 = vld [vmem:[#allocation5 + $0x940] sm:$0xff]
    %v372 = vld [vmem:[#allocation5 + $0x948] sm:$0xff]
    %v373 = vld [vmem:[#allocation5 + $0x950] sm:$0xff]
    %v374 = vld [vmem:[#allocation5 + $0x958] sm:$0xff]
    %v375 = vld [vmem:[#allocation5 + $0x960] sm:$0xff]
    %v376 = vld [vmem:[#allocation5 + $0x968] sm:$0xff]
    %v377 = vld [vmem:[#allocation5 + $0x970] sm:$0xff]
    %v378 = vld [vmem:[#allocation5 + $0x978] sm:$0xff]
    %v379 = vld [vmem:[#allocation5 + $0x980] sm:$0xff]
    %v380 = vld [vmem:[#allocation5 + $0x988] sm:$0xff]
    %v381 = vld [vmem:[#allocation5 + $0x990] sm:$0xff]
    %v382 = vld [vmem:[#allocation5 + $0x998] sm:$0xff]
    %v383 = vld [vmem:[#allocation5 + $0x9a0] sm:$0xff]
    %v384 = vld [vmem:[#allocation5 + $0x9a8] sm:$0xff]
    %v385 = vld [vmem:[#allocation5 + $0x9b0] sm:$0xff]
    %v386 = vld [vmem:[#allocation5 + $0x9b8] sm:$0xff]
    %v387 = vld [vmem:[#allocation5 + $0x9c0] sm:$0xff]
    %v388 = vld [vmem:[#allocation5 + $0x9c8] sm:$0xff]
    %v389 = vld [vmem:[#allocation5 + $0x9d0] sm:$0xff]
    %v390 = vld [vmem:[#allocation5 + $0x9d8] sm:$0xff]
    %v391 = vld [vmem:[#allocation5 + $0x9e0] sm:$0xff]
    %v392 = vld [vmem:[#allocation5 + $0x9e8] sm:$0xff]
    %v393 = vld [vmem:[#allocation5 + $0x9f0] sm:$0xff]
    %v394 = vld [vmem:[#allocation5 + $0x9f8] sm:$0xff]
    %v395 = vld [vmem:[#allocation5 + $0xa00] sm:$0xff]
    %v396 = vld [vmem:[#allocation5 + $0xa08] sm:$0xff]
    %v397 = vld [vmem:[#allocation5 + $0xa10] sm:$0xff]
    %v398 = vld [vmem:[#allocation5 + $0xa18] sm:$0xff]
    %v399 = vld [vmem:[#allocation5 + $0xa20] sm:$0xff]
    %v400 = vld [vmem:[#allocation5 + $0xa28] sm:$0xff]
    %v401 = vld [vmem:[#allocation5 + $0xa30] sm:$0xff]
    %v402 = vld [vmem:[#allocation5 + $0xa38] sm:$0xff]
    %v403 = vld [vmem:[#allocation5 + $0xa40] sm:$0xff]
    %v404 = vld [vmem:[#allocation5 + $0xa48] sm:$0xff]
    %v405 = vld [vmem:[#allocation5 + $0xa50] sm:$0xff]
    %v406 = vld [vmem:[#allocation5 + $0xa58] sm:$0xff]
    %v407 = vld [vmem:[#allocation5 + $0xa60] sm:$0xff]
    %v408 = vld [vmem:[#allocation5 + $0xa68] sm:$0xff]
    %v409 = vld [vmem:[#allocation5 + $0xa70] sm:$0xff]
    %v410 = vld [vmem:[#allocation5 + $0xa78] sm:$0xff]
    %v411 = vld [vmem:[#allocation5 + $0xa80] sm:$0xff]
    %v412 = vld [vmem:[#allocation5 + $0xa88] sm:$0xff]
    %v413 = vld [vmem:[#allocation5 + $0xa90] sm:$0xff]
    %v414 = vld [vmem:[#allocation5 + $0xa98] sm:$0xff]
    %v415 = vld [vmem:[#allocation5 + $0xaa0] sm:$0xff]
    %v416 = vld [vmem:[#allocation5 + $0xaa8] sm:$0xff]
    %v417 = vld [vmem:[#allocation5 + $0xab0] sm:$0xff]
    %v418 = vld [vmem:[#allocation5 + $0xab8] sm:$0xff]
    %v419 = vld [vmem:[#allocation5 + $0xac0] sm:$0xff]
    %v420 = vld [vmem:[#allocation5 + $0xac8] sm:$0xff]
    %v421 = vld [vmem:[#allocation5 + $0xad0] sm:$0xff]
    %v422 = vld [vmem:[#allocation5 + $0xad8] sm:$0xff]
    %v423 = vld [vmem:[#allocation5 + $0xae0] sm:$0xff]
    %v424 = vld [vmem:[#allocation5 + $0xae8] sm:$0xff]
    %v425 = vld [vmem:[#allocation5 + $0xaf0] sm:$0xff]
    %v426 = vld [vmem:[#allocation5 + $0xaf8] sm:$0xff]
    %v427 = vld [vmem:[#allocation5 + $0xb00] sm:$0xff]
    %v428 = vld [vmem:[#allocation5 + $0xb08] sm:$0xff]
    %v429 = vld [vmem:[#allocation5 + $0xb10] sm:$0xff]
    %v430 = vld [vmem:[#allocation5 + $0xb18] sm:$0xff]
    %v431 = vld [vmem:[#allocation5 + $0xb20] sm:$0xff]
    %v432 = vld [vmem:[#allocation5 + $0xb28] sm:$0xff]
    %v433 = vld [vmem:[#allocation5 + $0xb30] sm:$0xff]
    %v434 = vld [vmem:[#allocation5 + $0xb38] sm:$0xff]
    %v435 = vld [vmem:[#allocation5 + $0xb40] sm:$0xff]
    %v436 = vld [vmem:[#allocation5 + $0xb48] sm:$0xff]
    %v437 = vld [vmem:[#allocation5 + $0xb50] sm:$0xff]
    %v438 = vld [vmem:[#allocation5 + $0xb58] sm:$0xff]
    %v439 = vld [vmem:[#allocation5 + $0xb60] sm:$0xff]
    %v440 = vld [vmem:[#allocation5 + $0xb68] sm:$0xff]
    %v441 = vld [vmem:[#allocation5 + $0xb70] sm:$0xff]
    %v442 = vld [vmem:[#allocation5 + $0xb78] sm:$0xff]
    %v443 = vld [vmem:[#allocation5 + $0xb80] sm:$0xff]
    %v444 = vld [vmem:[#allocation5 + $0xb88] sm:$0xff]
    %v445 = vld [vmem:[#allocation5 + $0xb90] sm:$0xff]
    %v446 = vld [vmem:[#allocation5 + $0xb98] sm:$0xff]
    %v447 = vld [vmem:[#allocation5 + $0xba0] sm:$0xff]
    %v448 = vld [vmem:[#allocation5 + $0xba8] sm:$0xff]
    %v449 = vld [vmem:[#allocation5 + $0xbb0] sm:$0xff]
    %v450 = vld [vmem:[#allocation5 + $0xbb8] sm:$0xff]
    %v451 = vld [vmem:[#allocation5 + $0xbc0] sm:$0xff]
    %v452 = vld [vmem:[#allocation5 + $0xbc8] sm:$0xff]
    %v453 = vld [vmem:[#allocation5 + $0xbd0] sm:$0xff]
    %v454 = vld [vmem:[#allocation5 + $0xbd8] sm:$0xff]
    %v455 = vld [vmem:[#allocation5 + $0xbe0] sm:$0xff]
    %v456 = vld [vmem:[#allocation5 + $0xbe8] sm:$0xff]
    %v457 = vld [vmem:[#allocation5 + $0xbf0] sm:$0xff]
    %v458 = vld [vmem:[#allocation5 + $0xbf8] sm:$0xff]
    %v459 = vld [vmem:[#allocation5 + $0xc00] sm:$0xff]
    %v460 = vld [vmem:[#allocation5 + $0xc08] sm:$0xff]
    %v461 = vld [vmem:[#allocation5 + $0xc10] sm:$0xff]
    %v462 = vld [vmem:[#allocation5 + $0xc18] sm:$0xff]
    %v463 = vld [vmem:[#allocation5 + $0xc20] sm:$0xff]
    %v464 = vld [vmem:[#allocation5 + $0xc28] sm:$0xff]
    %v465 = vld [vmem:[#allocation5 + $0xc30] sm:$0xff]
    %v466 = vld [vmem:[#allocation5 + $0xc38] sm:$0xff]
    %v467 = vld [vmem:[#allocation5 + $0xc40] sm:$0xff]
    %v468 = vld [vmem:[#allocation5 + $0xc48] sm:$0xff]
    %v469 = vld [vmem:[#allocation5 + $0xc50] sm:$0xff]
    %v470 = vld [vmem:[#allocation5 + $0xc58] sm:$0xff]
    %v471 = vld [vmem:[#allocation5 + $0xc60] sm:$0xff]
    %v472 = vld [vmem:[#allocation5 + $0xc68] sm:$0xff]
    %v473 = vld [vmem:[#allocation5 + $0xc70] sm:$0xff]
    %v474 = vld [vmem:[#allocation5 + $0xc78] sm:$0xff]
    %v475 = vld [vmem:[#allocation5 + $0xc80] sm:$0xff]
    %v476 = vld [vmem:[#allocation5 + $0xc88] sm:$0xff]
    %v477 = vld [vmem:[#allocation5 + $0xc90] sm:$0xff]
    %v478 = vld [vmem:[#allocation5 + $0xc98] sm:$0xff]
    %v479 = vld [vmem:[#allocation5 + $0xca0] sm:$0xff]
    %v480 = vld [vmem:[#allocation5 + $0xca8] sm:$0xff]
    %v481 = vld [vmem:[#allocation5 + $0xcb0] sm:$0xff]
    %v482 = vld [vmem:[#allocation5 + $0xcb8] sm:$0xff]
    %v483 = vld [vmem:[#allocation5 + $0xcc0] sm:$0xff]
    %v484 = vld [vmem:[#allocation5 + $0xcc8] sm:$0xff]
    %v485 = vld [vmem:[#allocation5 + $0xcd0] sm:$0xff]
    %v486 = vld [vmem:[#allocation5 + $0xcd8] sm:$0xff]
    %v487 = vld [vmem:[#allocation5 + $0xce0] sm:$0xff]
    %v488 = vld [vmem:[#allocation5 + $0xce8] sm:$0xff]
    %v489 = vld [vmem:[#allocation5 + $0xcf0] sm:$0xff]
    %v490 = vld [vmem:[#allocation5 + $0xcf8] sm:$0xff]
    %v491 = vld [vmem:[#allocation5 + $0xd00] sm:$0xff]
    %v492 = vld [vmem:[#allocation5 + $0xd08] sm:$0xff]
    %v493 = vld [vmem:[#allocation5 + $0xd10] sm:$0xff]
    %v494 = vld [vmem:[#allocation5 + $0xd18] sm:$0xff]
    %v495 = vld [vmem:[#allocation5 + $0xd20] sm:$0xff]
    %v496 = vld [vmem:[#allocation5 + $0xd28] sm:$0xff]
    %v497 = vld [vmem:[#allocation5 + $0xd30] sm:$0xff]
    %v498 = vld [vmem:[#allocation5 + $0xd38] sm:$0xff]
    %v499 = vld [vmem:[#allocation5 + $0xd40] sm:$0xff]
    %v500 = vld [vmem:[#allocation5 + $0xd48] sm:$0xff]
    %v501 = vld [vmem:[#allocation5 + $0xd50] sm:$0xff]
    %v502 = vld [vmem:[#allocation5 + $0xd58] sm:$0xff]
    %v503 = vld [vmem:[#allocation5 + $0xd60] sm:$0xff]
    %v504 = vld [vmem:[#allocation5 + $0xd68] sm:$0xff]
    %v505 = vld [vmem:[#allocation5 + $0xd70] sm:$0xff]
    %v506 = vld [vmem:[#allocation5 + $0xd78] sm:$0xff]
    %v507 = vld [vmem:[#allocation5 + $0xd80] sm:$0xff]
    %v508 = vld [vmem:[#allocation5 + $0xd88] sm:$0xff]
    %v509 = vld [vmem:[#allocation5 + $0xd90] sm:$0xff]
    %v510 = vld [vmem:[#allocation5 + $0xd98] sm:$0xff]
    %v511 = vld [vmem:[#allocation5 + $0xda0] sm:$0xff]
    %v512 = vld [vmem:[#allocation5 + $0xda8] sm:$0xff]
    %v513 = vld [vmem:[#allocation5 + $0xdb0] sm:$0xff]
    %v514 = vld [vmem:[#allocation5 + $0xdb8] sm:$0xff]
    %v515 = vld [vmem:[#allocation5 + $0xdc0] sm:$0xff]
    %v516 = vld [vmem:[#allocation5 + $0xdc8] sm:$0xff]
    %v517 = vld [vmem:[#allocation5 + $0xdd0] sm:$0xff]
    %v518 = vld [vmem:[#allocation5 + $0xdd8] sm:$0xff]
    %v519 = vld [vmem:[#allocation5 + $0xde0] sm:$0xff]
    %v520 = vld [vmem:[#allocation5 + $0xde8] sm:$0xff]
    %v521 = vld [vmem:[#allocation5 + $0xdf0] sm:$0xff]
    %v522 = vld [vmem:[#allocation5 + $0xdf8] sm:$0xff]
    %v523 = vld [vmem:[#allocation5 + $0xe00] sm:$0xff]
    %v524 = vld [vmem:[#allocation5 + $0xe08] sm:$0xff]
    %v525 = vld [vmem:[#allocation5 + $0xe10] sm:$0xff]
    %v526 = vld [vmem:[#allocation5 + $0xe18] sm:$0xff]
    %v527 = vld [vmem:[#allocation5 + $0xe20] sm:$0xff]
    %v528 = vld [vmem:[#allocation5 + $0xe28] sm:$0xff]
    %v529 = vld [vmem:[#allocation5 + $0xe30] sm:$0xff]
    %v530 = vld [vmem:[#allocation5 + $0xe38] sm:$0xff]
    %v531 = vld [vmem:[#allocation5 + $0xe40] sm:$0xff]
    %v532 = vld [vmem:[#allocation5 + $0xe48] sm:$0xff]
    %v533 = vld [vmem:[#allocation5 + $0xe50] sm:$0xff]
    %v534 = vld [vmem:[#allocation5 + $0xe58] sm:$0xff]
    %v535 = vld [vmem:[#allocation5 + $0xe60] sm:$0xff]
    %v536 = vld [vmem:[#allocation5 + $0xe68] sm:$0xff]
    %v537 = vld [vmem:[#allocation5 + $0xe70] sm:$0xff]
    %v538 = vld [vmem:[#allocation5 + $0xe78] sm:$0xff]
    %v539 = vld [vmem:[#allocation5 + $0xe80] sm:$0xff]
    %v540 = vld [vmem:[#allocation5 + $0xe88] sm:$0xff]
    %v541 = vld [vmem:[#allocation5 + $0xe90] sm:$0xff]
    %v542 = vld [vmem:[#allocation5 + $0xe98] sm:$0xff]
    %v543 = vld [vmem:[#allocation5 + $0xea0] sm:$0xff]
    %v544 = vld [vmem:[#allocation5 + $0xea8] sm:$0xff]
    %v545 = vld [vmem:[#allocation5 + $0xeb0] sm:$0xff]
    %v546 = vld [vmem:[#allocation5 + $0xeb8] sm:$0xff]
    %v547 = vld [vmem:[#allocation5 + $0xec0] sm:$0xff]
    %v548 = vld [vmem:[#allocation5 + $0xec8] sm:$0xff]
    %v549 = vld [vmem:[#allocation5 + $0xed0] sm:$0xff]
    %v550 = vld [vmem:[#allocation5 + $0xed8] sm:$0xff]
    %v551 = vld [vmem:[#allocation5 + $0xee0] sm:$0xff]
    %v552 = vld [vmem:[#allocation5 + $0xee8] sm:$0xff]
    %v553 = vld [vmem:[#allocation5 + $0xef0] sm:$0xff]
    %v554 = vld [vmem:[#allocation5 + $0xef8] sm:$0xff]
    %v555 = vld [vmem:[#allocation5 + $0xf00] sm:$0xff]
    %v556 = vld [vmem:[#allocation5 + $0xf08] sm:$0xff]
    %v557 = vld [vmem:[#allocation5 + $0xf10] sm:$0xff]
    %v558 = vld [vmem:[#allocation5 + $0xf18] sm:$0xff]
    %v559 = vld [vmem:[#allocation5 + $0xf20] sm:$0xff]
    %v560 = vld [vmem:[#allocation5 + $0xf28] sm:$0xff]
    %v561 = vld [vmem:[#allocation5 + $0xf30] sm:$0xff]
    %v562 = vld [vmem:[#allocation5 + $0xf38] sm:$0xff]
    %v563 = vld [vmem:[#allocation5 + $0xf40] sm:$0xff]
    %v564 = vld [vmem:[#allocation5 + $0xf48] sm:$0xff]
    %v565 = vld [vmem:[#allocation5 + $0xf50] sm:$0xff]
    %v566 = vld [vmem:[#allocation5 + $0xf58] sm:$0xff]
    %v567 = vld [vmem:[#allocation5 + $0xf60] sm:$0xff]
    %v568 = vld [vmem:[#allocation5 + $0xf68] sm:$0xff]
    %v569 = vld [vmem:[#allocation5 + $0xf70] sm:$0xff]
    %v570 = vld [vmem:[#allocation5 + $0xf78] sm:$0xff]
    %v571 = vld [vmem:[#allocation5 + $0xf80] sm:$0xff]
    %v572 = vld [vmem:[#allocation5 + $0xf88] sm:$0xff]
    %v573 = vld [vmem:[#allocation5 + $0xf90] sm:$0xff]
    %v574 = vld [vmem:[#allocation5 + $0xf98] sm:$0xff]
    %v575 = vld [vmem:[#allocation5 + $0xfa0] sm:$0xff]
    %v576 = vld [vmem:[#allocation5 + $0xfa8] sm:$0xff]
    %v577 = vld [vmem:[#allocation5 + $0xfb0] sm:$0xff]
    %v578 = vld [vmem:[#allocation5 + $0xfb8] sm:$0xff]
    %v579 = vld [vmem:[#allocation5 + $0xfc0] sm:$0xff]
    %v580 = vld [vmem:[#allocation5 + $0xfc8] sm:$0xff]
    %v581 = vld [vmem:[#allocation5 + $0xfd0] sm:$0xff]
    %v582 = vld [vmem:[#allocation5 + $0xfd8] sm:$0xff]
    %v583 = vld [vmem:[#allocation5 + $0xfe0] sm:$0xff]
    %v584 = vld [vmem:[#allocation5 + $0xfe8] sm:$0xff]
    %v585 = vld [vmem:[#allocation5 + $0xff0] sm:$0xff]
    %v586 = vld [vmem:[#allocation5 + $0xff8] sm:$0xff]
    %v587 = vld [vmem:[#allocation5 + $0x1000] sm:$0xff]
    %v588 = vld [vmem:[#allocation5 + $0x1008] sm:$0xff]
    %v589 = vld [vmem:[#allocation5 + $0x1010] sm:$0xff]
    %v590 = vld [vmem:[#allocation5 + $0x1018] sm:$0xff]
    %v591 = vld [vmem:[#allocation5 + $0x1020] sm:$0xff]
    %v592 = vld [vmem:[#allocation5 + $0x1028] sm:$0xff]
    %v593 = vld [vmem:[#allocation5 + $0x1030] sm:$0xff]
    %v594 = vld [vmem:[#allocation5 + $0x1038] sm:$0xff]
    %v595 = vld [vmem:[#allocation5 + $0x1040] sm:$0xff]
    %v596 = vld [vmem:[#allocation5 + $0x1048] sm:$0xff]
    %v597 = vld [vmem:[#allocation5 + $0x1050] sm:$0xff]
    %v598 = vld [vmem:[#allocation5 + $0x1058] sm:$0xff]
    %v599 = vld [vmem:[#allocation5 + $0x1060] sm:$0xff]
    %v600 = vld [vmem:[#allocation5 + $0x1068] sm:$0xff]
    %v601 = vld [vmem:[#allocation5 + $0x1070] sm:$0xff]
    %v602 = vld [vmem:[#allocation5 + $0x1078] sm:$0xff]
    %v603 = vld [vmem:[#allocation5 + $0x1080] sm:$0xff]
    %v604 = vld [vmem:[#allocation5 + $0x1088] sm:$0xff]
    %v605 = vld [vmem:[#allocation5 + $0x1090] sm:$0xff]
    %v606 = vld [vmem:[#allocation5 + $0x1098] sm:$0xff]
    %v607 = vld [vmem:[#allocation5 + $0x10a0] sm:$0xff]
    %v608 = vld [vmem:[#allocation5 + $0x10a8] sm:$0xff]
    %v609 = vld [vmem:[#allocation5 + $0x10b0] sm:$0xff]
    %v610 = vld [vmem:[#allocation5 + $0x10b8] sm:$0xff]
    %v611 = vld [vmem:[#allocation5 + $0x10c0] sm:$0xff]
    %v612 = vld [vmem:[#allocation5 + $0x10c8] sm:$0xff]
    %v613 = vld [vmem:[#allocation5 + $0x10d0] sm:$0xff]
    %v614 = vld [vmem:[#allocation5 + $0x10d8] sm:$0xff]
    %v615 = vld [vmem:[#allocation5 + $0x10e0] sm:$0xff]
    %v616 = vld [vmem:[#allocation5 + $0x10e8] sm:$0xff]
    %v617 = vld [vmem:[#allocation5 + $0x10f0] sm:$0xff]
    %v618 = vld [vmem:[#allocation5 + $0x10f8] sm:$0xff]
    %v619 = vld [vmem:[#allocation5 + $0x1100] sm:$0xff]
    %v620 = vld [vmem:[#allocation5 + $0x1108] sm:$0xff]
    %v621 = vld [vmem:[#allocation5 + $0x1110] sm:$0xff]
    %v622 = vld [vmem:[#allocation5 + $0x1118] sm:$0xff]
    %v623 = vld [vmem:[#allocation5 + $0x1120] sm:$0xff]
    %v624 = vld [vmem:[#allocation5 + $0x1128] sm:$0xff]
    %v625 = vld [vmem:[#allocation5 + $0x1130] sm:$0xff]
    %v626 = vld [vmem:[#allocation5 + $0x1138] sm:$0xff]
    %v627 = vld [vmem:[#allocation5 + $0x1140] sm:$0xff]
    %v628 = vld [vmem:[#allocation5 + $0x1148] sm:$0xff]
    %v629 = vld [vmem:[#allocation5 + $0x1150] sm:$0xff]
    %v630 = vld [vmem:[#allocation5 + $0x1158] sm:$0xff]
    %v631 = vld [vmem:[#allocation5 + $0x1160] sm:$0xff]
    %v632 = vld [vmem:[#allocation5 + $0x1168] sm:$0xff]
    %v633 = vld [vmem:[#allocation5 + $0x1170] sm:$0xff]
    %v634 = vld [vmem:[#allocation5 + $0x1178] sm:$0xff]
    %v635 = vld [vmem:[#allocation5 + $0x1180] sm:$0xff]
    %v636 = vld [vmem:[#allocation5 + $0x1188] sm:$0xff]
    %v637 = vld [vmem:[#allocation5 + $0x1190] sm:$0xff]
    %v638 = vld [vmem:[#allocation5 + $0x1198] sm:$0xff]
    %v639 = vld [vmem:[#allocation5 + $0x11a0] sm:$0xff]
    %v640 = vld [vmem:[#allocation5 + $0x11a8] sm:$0xff]
    %v641 = vld [vmem:[#allocation5 + $0x11b0] sm:$0xff]
    %v642 = vld [vmem:[#allocation5 + $0x11b8] sm:$0xff]
    %v643 = vld [vmem:[#allocation5 + $0x11c0] sm:$0xff]
    %v644 = vld [vmem:[#allocation5 + $0x11c8] sm:$0xff]
    %v645 = vld [vmem:[#allocation5 + $0x11d0] sm:$0xff]
    %v646 = vld [vmem:[#allocation5 + $0x11d8] sm:$0xff]
    %v647 = vld [vmem:[#allocation5 + $0x11e0] sm:$0xff]
    %v648 = vld [vmem:[#allocation5 + $0x11e8] sm:$0xff]
    %v649 = vld [vmem:[#allocation5 + $0x11f0] sm:$0xff]
    %v650 = vld [vmem:[#allocation5 + $0x11f8] sm:$0xff]
    %v651 = vld [vmem:[#allocation5 + $0x1200] sm:$0xff]
    %v652 = vld [vmem:[#allocation5 + $0x1208] sm:$0xff]
    %v653 = vld [vmem:[#allocation5 + $0x1210] sm:$0xff]
    %v654 = vld [vmem:[#allocation5 + $0x1218] sm:$0xff]
    %v655 = vld [vmem:[#allocation5 + $0x1220] sm:$0xff]
    %v656 = vld [vmem:[#allocation5 + $0x1228] sm:$0xff]
    %v657 = vld [vmem:[#allocation5 + $0x1230] sm:$0xff]
    %v658 = vld [vmem:[#allocation5 + $0x1238] sm:$0xff]
    %v659 = vld [vmem:[#allocation5 + $0x1240] sm:$0xff]
    %v660 = vld [vmem:[#allocation5 + $0x1248] sm:$0xff]
    %v661 = vld [vmem:[#allocation5 + $0x1250] sm:$0xff]
    %v662 = vld [vmem:[#allocation5 + $0x1258] sm:$0xff]
    %v663 = vld [vmem:[#allocation5 + $0x1260] sm:$0xff]
    %v664 = vld [vmem:[#allocation5 + $0x1268] sm:$0xff]
    %v665 = vld [vmem:[#allocation5 + $0x1270] sm:$0xff]
    %v666 = vld [vmem:[#allocation5 + $0x1278] sm:$0xff]
    %v667 = vld [vmem:[#allocation5 + $0x1280] sm:$0xff]
    %v668 = vld [vmem:[#allocation5 + $0x1288] sm:$0xff]
    %v669 = vld [vmem:[#allocation5 + $0x1290] sm:$0xff]
    %v670 = vld [vmem:[#allocation5 + $0x1298] sm:$0xff]
    %v671 = vld [vmem:[#allocation5 + $0x12a0] sm:$0xff]
    %v672 = vld [vmem:[#allocation5 + $0x12a8] sm:$0xff]
    %v673 = vld [vmem:[#allocation5 + $0x12b0] sm:$0xff]
    %v674 = vld [vmem:[#allocation5 + $0x12b8] sm:$0xff]
    %v675 = vld [vmem:[#allocation5 + $0x12c0] sm:$0xff]
    %v676 = vld [vmem:[#allocation5 + $0x12c8] sm:$0xff]
    %v677 = vld [vmem:[#allocation5 + $0x12d0] sm:$0xff]
    %v678 = vld [vmem:[#allocation5 + $0x12d8] sm:$0xff]
    %v679 = vld [vmem:[#allocation5 + $0x12e0] sm:$0xff]
    %v680 = vld [vmem:[#allocation5 + $0x12e8] sm:$0xff]
    %v681 = vld [vmem:[#allocation5 + $0x12f0] sm:$0xff]
    %v682 = vld [vmem:[#allocation5 + $0x12f8] sm:$0xff]
    %v683 = vld [vmem:[#allocation5 + $0x1300] sm:$0xff]
    %v684 = vld [vmem:[#allocation5 + $0x1308] sm:$0xff]
    %v685 = vld [vmem:[#allocation5 + $0x1310] sm:$0xff]
    %v686 = vld [vmem:[#allocation5 + $0x1318] sm:$0xff]
    %v687 = vld [vmem:[#allocation5 + $0x1320] sm:$0xff]
    %v688 = vld [vmem:[#allocation5 + $0x1328] sm:$0xff]
    %v689 = vld [vmem:[#allocation5 + $0x1330] sm:$0xff]
    %v690 = vld [vmem:[#allocation5 + $0x1338] sm:$0xff]
    %v691 = vld [vmem:[#allocation5 + $0x1340] sm:$0xff]
    %v692 = vld [vmem:[#allocation5 + $0x1348] sm:$0xff]
    %v693 = vld [vmem:[#allocation5 + $0x1350] sm:$0xff]
    %v694 = vld [vmem:[#allocation5 + $0x1358] sm:$0xff]
    %v695 = vld [vmem:[#allocation5 + $0x1360] sm:$0xff]
    %v696 = vld [vmem:[#allocation5 + $0x1368] sm:$0xff]
    %v697 = vld [vmem:[#allocation5 + $0x1370] sm:$0xff]
    %v698 = vld [vmem:[#allocation5 + $0x1378] sm:$0xff]
    %v699 = vld [vmem:[#allocation5 + $0x1380] sm:$0xff]
    %v700 = vld [vmem:[#allocation5 + $0x1388] sm:$0xff]
    %v701 = vld [vmem:[#allocation5 + $0x1390] sm:$0xff]
    %v702 = vld [vmem:[#allocation5 + $0x1398] sm:$0xff]
    %v703 = vld [vmem:[#allocation5 + $0x13a0] sm:$0xff]
    %v704 = vld [vmem:[#allocation5 + $0x13a8] sm:$0xff]
    %v705 = vld [vmem:[#allocation5 + $0x13b0] sm:$0xff]
    %v706 = vld [vmem:[#allocation5 + $0x13b8] sm:$0xff]
    %v707 = vld [vmem:[#allocation5 + $0x13c0] sm:$0xff]
    %v708 = vld [vmem:[#allocation5 + $0x13c8] sm:$0xff]
    %v709 = vld [vmem:[#allocation5 + $0x13d0] sm:$0xff]
    %v710 = vld [vmem:[#allocation5 + $0x13d8] sm:$0xff]
    %v711 = vld [vmem:[#allocation5 + $0x13e0] sm:$0xff]
    %v712 = vld [vmem:[#allocation5 + $0x13e8] sm:$0xff]
    %v713 = vld [vmem:[#allocation5 + $0x13f0] sm:$0xff]
    %v714 = vld [vmem:[#allocation5 + $0x13f8] sm:$0xff]
    %v715 = vld [vmem:[#allocation5 + $0x1400] sm:$0xff]
    %v716 = vld [vmem:[#allocation5 + $0x1408] sm:$0xff]
    %v717 = vld [vmem:[#allocation5 + $0x1410] sm:$0xff]
    %v718 = vld [vmem:[#allocation5 + $0x1418] sm:$0xff]
    %v719 = vld [vmem:[#allocation5 + $0x1420] sm:$0xff]
    %v720 = vld [vmem:[#allocation5 + $0x1428] sm:$0xff]
    %v721 = vld [vmem:[#allocation5 + $0x1430] sm:$0xff]
    %v722 = vld [vmem:[#allocation5 + $0x1438] sm:$0xff]
    %v723 = vld [vmem:[#allocation5 + $0x1440] sm:$0xff]
    %v724 = vld [vmem:[#allocation5 + $0x1448] sm:$0xff]
    %v725 = vld [vmem:[#allocation5 + $0x1450] sm:$0xff]
    %v726 = vld [vmem:[#allocation5 + $0x1458] sm:$0xff]
    %v727 = vld [vmem:[#allocation5 + $0x1460] sm:$0xff]
    %v728 = vld [vmem:[#allocation5 + $0x1468] sm:$0xff]
    %v729 = vld [vmem:[#allocation5 + $0x1470] sm:$0xff]
    %v730 = vld [vmem:[#allocation5 + $0x1478] sm:$0xff]
    %v731 = vld [vmem:[#allocation5 + $0x1480] sm:$0xff]
    %v732 = vld [vmem:[#allocation5 + $0x1488] sm:$0xff]
    %v733 = vld [vmem:[#allocation5 + $0x1490] sm:$0xff]
    %v734 = vld [vmem:[#allocation5 + $0x1498] sm:$0xff]
    %v735 = vld [vmem:[#allocation5 + $0x14a0] sm:$0xff]
    %v736 = vld [vmem:[#allocation5 + $0x14a8] sm:$0xff]
    %v737 = vld [vmem:[#allocation5 + $0x14b0] sm:$0xff]
    %v738 = vld [vmem:[#allocation5 + $0x14b8] sm:$0xff]
    %v739 = vld [vmem:[#allocation5 + $0x14c0] sm:$0xff]
    %v740 = vld [vmem:[#allocation5 + $0x14c8] sm:$0xff]
    %v741 = vld [vmem:[#allocation5 + $0x14d0] sm:$0xff]
    %v742 = vld [vmem:[#allocation5 + $0x14d8] sm:$0xff]
    %v743 = vld [vmem:[#allocation5 + $0x14e0] sm:$0xff]
    %v744 = vld [vmem:[#allocation5 + $0x14e8] sm:$0xff]
    %v745 = vld [vmem:[#allocation5 + $0x14f0] sm:$0xff]
    %v746 = vld [vmem:[#allocation5 + $0x14f8] sm:$0xff]
    %v747 = vld [vmem:[#allocation5 + $0x1500] sm:$0xff]
    %v748 = vld [vmem:[#allocation5 + $0x1508] sm:$0xff]
    %v749 = vld [vmem:[#allocation5 + $0x1510] sm:$0xff]
    %v750 = vld [vmem:[#allocation5 + $0x1518] sm:$0xff]
    %v751 = vld [vmem:[#allocation5 + $0x1520] sm:$0xff]
    %v752 = vld [vmem:[#allocation5 + $0x1528] sm:$0xff]
    %v753 = vld [vmem:[#allocation5 + $0x1530] sm:$0xff]
    %v754 = vld [vmem:[#allocation5 + $0x1538] sm:$0xff]
    %v755 = vld [vmem:[#allocation5 + $0x1540] sm:$0xff]
    %v756 = vld [vmem:[#allocation5 + $0x1548] sm:$0xff]
    %v757 = vld [vmem:[#allocation5 + $0x1550] sm:$0xff]
    %v758 = vld [vmem:[#allocation5 + $0x1558] sm:$0xff]
    %v759 = vld [vmem:[#allocation5 + $0x1560] sm:$0xff]
    %v760 = vld [vmem:[#allocation5 + $0x1568] sm:$0xff]
    %v761 = vld [vmem:[#allocation5 + $0x1570] sm:$0xff]
    %v762 = vld [vmem:[#allocation5 + $0x1578] sm:$0xff]
    %v763 = vld [vmem:[#allocation5 + $0x1580] sm:$0xff]
    %v764 = vld [vmem:[#allocation5 + $0x1588] sm:$0xff]
    %v765 = vld [vmem:[#allocation5 + $0x1590] sm:$0xff]
    %v766 = vld [vmem:[#allocation5 + $0x1598] sm:$0xff]
    %v767 = vld [vmem:[#allocation5 + $0x15a0] sm:$0xff]
    %v768 = vld [vmem:[#allocation5 + $0x15a8] sm:$0xff]
    %v769 = vld [vmem:[#allocation5 + $0x15b0] sm:$0xff]
    %v770 = vld [vmem:[#allocation5 + $0x15b8] sm:$0xff]
    %v771 = vld [vmem:[#allocation5 + $0x15c0] sm:$0xff]
    %v772 = vld [vmem:[#allocation5 + $0x15c8] sm:$0xff]
    %v773 = vld [vmem:[#allocation5 + $0x15d0] sm:$0xff]
    %v774 = vld [vmem:[#allocation5 + $0x15d8] sm:$0xff]
    %v775 = vld [vmem:[#allocation5 + $0x15e0] sm:$0xff]
    %v776 = vld [vmem:[#allocation5 + $0x15e8] sm:$0xff]
    %v777 = vld [vmem:[#allocation5 + $0x15f0] sm:$0xff]
    %v778 = vld [vmem:[#allocation5 + $0x15f8] sm:$0xff]
    %v779 = vld [vmem:[#allocation5 + $0x1600] sm:$0xff]
    %v780 = vld [vmem:[#allocation5 + $0x1608] sm:$0xff]
    %v781 = vld [vmem:[#allocation5 + $0x1610] sm:$0xff]
    %v782 = vld [vmem:[#allocation5 + $0x1618] sm:$0xff]
    %v783 = vld [vmem:[#allocation5 + $0x1620] sm:$0xff]
    %v784 = vld [vmem:[#allocation5 + $0x1628] sm:$0xff]
    %v785 = vld [vmem:[#allocation5 + $0x1630] sm:$0xff]
    %v786 = vld [vmem:[#allocation5 + $0x1638] sm:$0xff]
    %v787 = vld [vmem:[#allocation5 + $0x1640] sm:$0xff]
    %v788 = vld [vmem:[#allocation5 + $0x1648] sm:$0xff]
    %v789 = vld [vmem:[#allocation5 + $0x1650] sm:$0xff]
    %v790 = vld [vmem:[#allocation5 + $0x1658] sm:$0xff]
    %v791 = vld [vmem:[#allocation5 + $0x1660] sm:$0xff]
    %v792 = vld [vmem:[#allocation5 + $0x1668] sm:$0xff]
    %v793 = vld [vmem:[#allocation5 + $0x1670] sm:$0xff]
    %v794 = vld [vmem:[#allocation5 + $0x1678] sm:$0xff]
    %v795 = vld [vmem:[#allocation5 + $0x1680] sm:$0xff]
    %v796 = vld [vmem:[#allocation5 + $0x1688] sm:$0xff]
    %v797 = vld [vmem:[#allocation5 + $0x1690] sm:$0xff]
    %v798 = vld [vmem:[#allocation5 + $0x1698] sm:$0xff]
    %v799 = vld [vmem:[#allocation5 + $0x16a0] sm:$0xff]
    %v800 = vld [vmem:[#allocation5 + $0x16a8] sm:$0xff]
    %v801 = vld [vmem:[#allocation5 + $0x16b0] sm:$0xff]
    %v802 = vld [vmem:[#allocation5 + $0x16b8] sm:$0xff]
    %v803 = vld [vmem:[#allocation5 + $0x16c0] sm:$0xff]
    %v804 = vld [vmem:[#allocation5 + $0x16c8] sm:$0xff]
    %v805 = vld [vmem:[#allocation5 + $0x16d0] sm:$0xff]
    %v806 = vld [vmem:[#allocation5 + $0x16d8] sm:$0xff]
    %v807 = vld [vmem:[#allocation5 + $0x16e0] sm:$0xff]
    %v808 = vld [vmem:[#allocation5 + $0x16e8] sm:$0xff]
    %v809 = vld [vmem:[#allocation5 + $0x16f0] sm:$0xff]
    %v810 = vld [vmem:[#allocation5 + $0x16f8] sm:$0xff]
    %v811 = vld [vmem:[#allocation5 + $0x1700] sm:$0xff]
    %v812 = vld [vmem:[#allocation5 + $0x1708] sm:$0xff]
    %v813 = vld [vmem:[#allocation5 + $0x1710] sm:$0xff]
    %v814 = vld [vmem:[#allocation5 + $0x1718] sm:$0xff]
    %v815 = vld [vmem:[#allocation5 + $0x1720] sm:$0xff]
    %v816 = vld [vmem:[#allocation5 + $0x1728] sm:$0xff]
    %v817 = vld [vmem:[#allocation5 + $0x1730] sm:$0xff]
    %v818 = vld [vmem:[#allocation5 + $0x1738] sm:$0xff]
    %v819 = vld [vmem:[#allocation5 + $0x1740] sm:$0xff]
    %v820 = vld [vmem:[#allocation5 + $0x1748] sm:$0xff]
    %v821 = vld [vmem:[#allocation5 + $0x1750] sm:$0xff]
    %v822 = vld [vmem:[#allocation5 + $0x1758] sm:$0xff]
    %v823 = vld [vmem:[#allocation5 + $0x1760] sm:$0xff]
    %v824 = vld [vmem:[#allocation5 + $0x1768] sm:$0xff]
    %v825 = vld [vmem:[#allocation5 + $0x1770] sm:$0xff]
    %v826 = vld [vmem:[#allocation5 + $0x1778] sm:$0xff]
    %v827 = vld [vmem:[#allocation5 + $0x1780] sm:$0xff]
    %v828 = vld [vmem:[#allocation5 + $0x1788] sm:$0xff]
    %v829 = vld [vmem:[#allocation5 + $0x1790] sm:$0xff]
    %v830 = vld [vmem:[#allocation5 + $0x1798] sm:$0xff]
    %v831 = vld [vmem:[#allocation5 + $0x17a0] sm:$0xff]
    %v832 = vld [vmem:[#allocation5 + $0x17a8] sm:$0xff]
    %v833 = vld [vmem:[#allocation5 + $0x17b0] sm:$0xff]
    %v834 = vld [vmem:[#allocation5 + $0x17b8] sm:$0xff]
    %v835 = vld [vmem:[#allocation5 + $0x17c0] sm:$0xff]
    %v836 = vld [vmem:[#allocation5 + $0x17c8] sm:$0xff]
    %v837 = vld [vmem:[#allocation5 + $0x17d0] sm:$0xff]
    %v838 = vld [vmem:[#allocation5 + $0x17d8] sm:$0xff]
    %v839 = vld [vmem:[#allocation5 + $0x17e0] sm:$0xff]
    %v840 = vld [vmem:[#allocation5 + $0x17e8] sm:$0xff]
    %v841 = vld [vmem:[#allocation5 + $0x17f0] sm:$0xff]
    %v842 = vld [vmem:[#allocation5 + $0x17f8] sm:$0xff]
    %v843 = vld [vmem:[#allocation5 + $0x1800] sm:$0xff]
    %v844 = vld [vmem:[#allocation5 + $0x1808] sm:$0xff]
    %v845 = vld [vmem:[#allocation5 + $0x1810] sm:$0xff]
    %v846 = vld [vmem:[#allocation5 + $0x1818] sm:$0xff]
    %v847 = vld [vmem:[#allocation5 + $0x1820] sm:$0xff]
    %v848 = vld [vmem:[#allocation5 + $0x1828] sm:$0xff]
    %v849 = vld [vmem:[#allocation5 + $0x1830] sm:$0xff]
    %v850 = vld [vmem:[#allocation5 + $0x1838] sm:$0xff]
    %v851 = vld [vmem:[#allocation5 + $0x1840] sm:$0xff]
    %v852 = vld [vmem:[#allocation5 + $0x1848] sm:$0xff]
    %v853 = vld [vmem:[#allocation5 + $0x1850] sm:$0xff]
    %v854 = vld [vmem:[#allocation5 + $0x1858] sm:$0xff]
    %v855 = vld [vmem:[#allocation5 + $0x1860] sm:$0xff]
    %v856 = vld [vmem:[#allocation5 + $0x1868] sm:$0xff]
    %v857 = vld [vmem:[#allocation5 + $0x1870] sm:$0xff]
    %v858 = vld [vmem:[#allocation5 + $0x1878] sm:$0xff]
    %v859 = vld [vmem:[#allocation5 + $0x1880] sm:$0xff]
    %v860 = vld [vmem:[#allocation5 + $0x1888] sm:$0xff]
    %v861 = vld [vmem:[#allocation5 + $0x1890] sm:$0xff]
    %v862 = vld [vmem:[#allocation5 + $0x1898] sm:$0xff]
    %v863 = vld [vmem:[#allocation5 + $0x18a0] sm:$0xff]
    %v864 = vld [vmem:[#allocation5 + $0x18a8] sm:$0xff]
    %v865 = vld [vmem:[#allocation5 + $0x18b0] sm:$0xff]
    %v866 = vld [vmem:[#allocation5 + $0x18b8] sm:$0xff]
    %v867 = vld [vmem:[#allocation5 + $0x18c0] sm:$0xff]
    %v868 = vld [vmem:[#allocation5 + $0x18c8] sm:$0xff]
    %v869 = vld [vmem:[#allocation5 + $0x18d0] sm:$0xff]
    %v870 = vld [vmem:[#allocation5 + $0x18d8] sm:$0xff]
    %v871 = vld [vmem:[#allocation5 + $0x18e0] sm:$0xff]
    %v872 = vld [vmem:[#allocation5 + $0x18e8] sm:$0xff]
    %v873 = vld [vmem:[#allocation5 + $0x18f0] sm:$0xff]
    %v874 = vld [vmem:[#allocation5 + $0x18f8] sm:$0xff]
    %v875 = vld [vmem:[#allocation5 + $0x1900] sm:$0xff]
    %v876 = vld [vmem:[#allocation5 + $0x1908] sm:$0xff]
    %v877 = vld [vmem:[#allocation5 + $0x1910] sm:$0xff]
    %v878 = vld [vmem:[#allocation5 + $0x1918] sm:$0xff]
    %v879 = vld [vmem:[#allocation5 + $0x1920] sm:$0xff]
    %v880 = vld [vmem:[#allocation5 + $0x1928] sm:$0xff]
    %v881 = vld [vmem:[#allocation5 + $0x1930] sm:$0xff]
    %v882 = vld [vmem:[#allocation5 + $0x1938] sm:$0xff]
    %v883 = vld [vmem:[#allocation5 + $0x1940] sm:$0xff]
    %v884 = vld [vmem:[#allocation5 + $0x1948] sm:$0xff]
    %v885 = vld [vmem:[#allocation5 + $0x1950] sm:$0xff]
    %v886 = vld [vmem:[#allocation5 + $0x1958] sm:$0xff]
    %v887 = vld [vmem:[#allocation5 + $0x1960] sm:$0xff]
    %v888 = vld [vmem:[#allocation5 + $0x1968] sm:$0xff]
    %v889 = vld [vmem:[#allocation5 + $0x1970] sm:$0xff]
    %v890 = vld [vmem:[#allocation5 + $0x1978] sm:$0xff]
    %v891 = vld [vmem:[#allocation5 + $0x1980] sm:$0xff]
    %v892 = vld [vmem:[#allocation5 + $0x1988] sm:$0xff]
    %v893 = vld [vmem:[#allocation5 + $0x1990] sm:$0xff]
    %v894 = vld [vmem:[#allocation5 + $0x1998] sm:$0xff]
    %v895 = vld [vmem:[#allocation5 + $0x19a0] sm:$0xff]
    %v896 = vld [vmem:[#allocation5 + $0x19a8] sm:$0xff]
    %v897 = vld [vmem:[#allocation5 + $0x19b0] sm:$0xff]
    %v898 = vld [vmem:[#allocation5 + $0x19b8] sm:$0xff]
    %v899 = vld [vmem:[#allocation5 + $0x19c0] sm:$0xff]
    %v900 = vld [vmem:[#allocation5 + $0x19c8] sm:$0xff]
    %v901 = vld [vmem:[#allocation5 + $0x19d0] sm:$0xff]
    %v902 = vld [vmem:[#allocation5 + $0x19d8] sm:$0xff]
    %v903 = vld [vmem:[#allocation5 + $0x19e0] sm:$0xff]
    %v904 = vld [vmem:[#allocation5 + $0x19e8] sm:$0xff]
    %v905 = vld [vmem:[#allocation5 + $0x19f0] sm:$0xff]
    %v906 = vld [vmem:[#allocation5 + $0x19f8] sm:$0xff]
    %v907 = vld [vmem:[#allocation5 + $0x1a00] sm:$0xff]
    %v908 = vld [vmem:[#allocation5 + $0x1a08] sm:$0xff]
    %v909 = vld [vmem:[#allocation5 + $0x1a10] sm:$0xff]
    %v910 = vld [vmem:[#allocation5 + $0x1a18] sm:$0xff]
    %v911 = vld [vmem:[#allocation5 + $0x1a20] sm:$0xff]
    %v912 = vld [vmem:[#allocation5 + $0x1a28] sm:$0xff]
    %v913 = vld [vmem:[#allocation5 + $0x1a30] sm:$0xff]
    %v914 = vld [vmem:[#allocation5 + $0x1a38] sm:$0xff]
    %v915 = vld [vmem:[#allocation5 + $0x1a40] sm:$0xff]
    %v916 = vld [vmem:[#allocation5 + $0x1a48] sm:$0xff]
    %v917 = vld [vmem:[#allocation5 + $0x1a50] sm:$0xff]
    %v918 = vld [vmem:[#allocation5 + $0x1a58] sm:$0xff]
    %v919 = vld [vmem:[#allocation5 + $0x1a60] sm:$0xff]
    %v920 = vld [vmem:[#allocation5 + $0x1a68] sm:$0xff]
    %v921 = vld [vmem:[#allocation5 + $0x1a70] sm:$0xff]
    %v922 = vld [vmem:[#allocation5 + $0x1a78] sm:$0xff]
    %v923 = vld [vmem:[#allocation5 + $0x1a80] sm:$0xff]
    %v924 = vld [vmem:[#allocation5 + $0x1a88] sm:$0xff]
    %v925 = vld [vmem:[#allocation5 + $0x1a90] sm:$0xff]
    %v926 = vld [vmem:[#allocation5 + $0x1a98] sm:$0xff]
    %v927 = vld [vmem:[#allocation5 + $0x1aa0] sm:$0xff]
    %v928 = vld [vmem:[#allocation5 + $0x1aa8] sm:$0xff]
    %v929 = vld [vmem:[#allocation5 + $0x1ab0] sm:$0xff]
    %v930 = vld [vmem:[#allocation5 + $0x1ab8] sm:$0xff]
    %v931 = vld [vmem:[#allocation5 + $0x1ac0] sm:$0xff]
    %v932 = vld [vmem:[#allocation5 + $0x1ac8] sm:$0xff]
    %v933 = vld [vmem:[#allocation5 + $0x1ad0] sm:$0xff]
    %v934 = vld [vmem:[#allocation5 + $0x1ad8] sm:$0xff]
    %v935 = vld [vmem:[#allocation5 + $0x1ae0] sm:$0xff]
    %v936 = vld [vmem:[#allocation5 + $0x1ae8] sm:$0xff]
    %v937 = vld [vmem:[#allocation5 + $0x1af0] sm:$0xff]
    %v938 = vld [vmem:[#allocation5 + $0x1af8] sm:$0xff]
    %v939 = vld [vmem:[#allocation5 + $0x1b00] sm:$0xff]
    %v940 = vld [vmem:[#allocation5 + $0x1b08] sm:$0xff]
    %v941 = vld [vmem:[#allocation5 + $0x1b10] sm:$0xff]
    %v942 = vld [vmem:[#allocation5 + $0x1b18] sm:$0xff]
    %v943 = vld [vmem:[#allocation5 + $0x1b20] sm:$0xff]
    %v944 = vld [vmem:[#allocation5 + $0x1b28] sm:$0xff]
    %v945 = vld [vmem:[#allocation5 + $0x1b30] sm:$0xff]
    %v946 = vld [vmem:[#allocation5 + $0x1b38] sm:$0xff]
    %v947 = vld [vmem:[#allocation5 + $0x1b40] sm:$0xff]
    %v948 = vld [vmem:[#allocation5 + $0x1b48] sm:$0xff]
    %v949 = vld [vmem:[#allocation5 + $0x1b50] sm:$0xff]
    %v950 = vld [vmem:[#allocation5 + $0x1b58] sm:$0xff]
    %v951 = vld [vmem:[#allocation5 + $0x1b60] sm:$0xff]
    %v952 = vld [vmem:[#allocation5 + $0x1b68] sm:$0xff]
    %v953 = vld [vmem:[#allocation5 + $0x1b70] sm:$0xff]
    %v954 = vld [vmem:[#allocation5 + $0x1b78] sm:$0xff]
    %v955 = vld [vmem:[#allocation5 + $0x1b80] sm:$0xff]
    %v956 = vld [vmem:[#allocation5 + $0x1b88] sm:$0xff]
    %v957 = vld [vmem:[#allocation5 + $0x1b90] sm:$0xff]
    %v958 = vld [vmem:[#allocation5 + $0x1b98] sm:$0xff]
    %v959 = vld [vmem:[#allocation5 + $0x1ba0] sm:$0xff]
    %v960 = vld [vmem:[#allocation5 + $0x1ba8] sm:$0xff]
    %v961 = vld [vmem:[#allocation5 + $0x1bb0] sm:$0xff]
    %v962 = vld [vmem:[#allocation5 + $0x1bb8] sm:$0xff]
    %v963 = vld [vmem:[#allocation5 + $0x1bc0] sm:$0xff]
    %v964 = vld [vmem:[#allocation5 + $0x1bc8] sm:$0xff]
    %v965 = vld [vmem:[#allocation5 + $0x1bd0] sm:$0xff]
    %v966 = vld [vmem:[#allocation5 + $0x1bd8] sm:$0xff]
    %v967 = vld [vmem:[#allocation5 + $0x1be0] sm:$0xff]
    %v968 = vld [vmem:[#allocation5 + $0x1be8] sm:$0xff]
    %v969 = vld [vmem:[#allocation5 + $0x1bf0] sm:$0xff]
    %v970 = vld [vmem:[#allocation5 + $0x1bf8] sm:$0xff]
    %v971 = vld [vmem:[#allocation5 + $0x1c00] sm:$0xff]
    %v972 = vld [vmem:[#allocation5 + $0x1c08] sm:$0xff]
    %v973 = vld [vmem:[#allocation5 + $0x1c10] sm:$0xff]
    %v974 = vld [vmem:[#allocation5 + $0x1c18] sm:$0xff]
    %v975 = vld [vmem:[#allocation5 + $0x1c20] sm:$0xff]
    %v976 = vld [vmem:[#allocation5 + $0x1c28] sm:$0xff]
    %v977 = vld [vmem:[#allocation5 + $0x1c30] sm:$0xff]
    %v978 = vld [vmem:[#allocation5 + $0x1c38] sm:$0xff]
    %v979 = vld [vmem:[#allocation5 + $0x1c40] sm:$0xff]
    %v980 = vld [vmem:[#allocation5 + $0x1c48] sm:$0xff]
    %v981 = vld [vmem:[#allocation5 + $0x1c50] sm:$0xff]
    %v982 = vld [vmem:[#allocation5 + $0x1c58] sm:$0xff]
    %v983 = vld [vmem:[#allocation5 + $0x1c60] sm:$0xff]
    %v984 = vld [vmem:[#allocation5 + $0x1c68] sm:$0xff]
    %v985 = vld [vmem:[#allocation5 + $0x1c70] sm:$0xff]
    %v986 = vld [vmem:[#allocation5 + $0x1c78] sm:$0xff]
    %v987 = vld [vmem:[#allocation5 + $0x1c80] sm:$0xff]
    %v988 = vld [vmem:[#allocation5 + $0x1c88] sm:$0xff]
    %v989 = vld [vmem:[#allocation5 + $0x1c90] sm:$0xff]
    %v990 = vld [vmem:[#allocation5 + $0x1c98] sm:$0xff]
    %v991 = vld [vmem:[#allocation5 + $0x1ca0] sm:$0xff]
    %v992 = vld [vmem:[#allocation5 + $0x1ca8] sm:$0xff]
    %v993 = vld [vmem:[#allocation5 + $0x1cb0] sm:$0xff]
    %v994 = vld [vmem:[#allocation5 + $0x1cb8] sm:$0xff]
    %v995 = vld [vmem:[#allocation5 + $0x1cc0] sm:$0xff]
    %v996 = vld [vmem:[#allocation5 + $0x1cc8] sm:$0xff]
    %v997 = vld [vmem:[#allocation5 + $0x1cd0] sm:$0xff]
    %v998 = vld [vmem:[#allocation5 + $0x1cd8] sm:$0xff]
    %v999 = vld [vmem:[#allocation5 + $0x1ce0] sm:$0xff]
    %v1000 = vld [vmem:[#allocation5 + $0x1ce8] sm:$0xff]
    %v1001 = vld [vmem:[#allocation5 + $0x1cf0] sm:$0xff]
    %v1002 = vld [vmem:[#allocation5 + $0x1cf8] sm:$0xff]
    %v1003 = vld [vmem:[#allocation5 + $0x1d00] sm:$0xff]
    %v1004 = vld [vmem:[#allocation5 + $0x1d08] sm:$0xff]
    %v1005 = vld [vmem:[#allocation5 + $0x1d10] sm:$0xff]
    %v1006 = vld [vmem:[#allocation5 + $0x1d18] sm:$0xff]
    %v1007 = vld [vmem:[#allocation5 + $0x1d20] sm:$0xff]
    %v1008 = vld [vmem:[#allocation5 + $0x1d28] sm:$0xff]
    %v1009 = vld [vmem:[#allocation5 + $0x1d30] sm:$0xff]
    %v1010 = vld [vmem:[#allocation5 + $0x1d38] sm:$0xff]
    %v1011 = vld [vmem:[#allocation5 + $0x1d40] sm:$0xff]
    %v1012 = vld [vmem:[#allocation5 + $0x1d48] sm:$0xff]
    %v1013 = vld [vmem:[#allocation5 + $0x1d50] sm:$0xff]
    %v1014 = vld [vmem:[#allocation5 + $0x1d58] sm:$0xff]
    %v1015 = vld [vmem:[#allocation5 + $0x1d60] sm:$0xff]
    %v1016 = vld [vmem:[#allocation5 + $0x1d68] sm:$0xff]
    %v1017 = vld [vmem:[#allocation5 + $0x1d70] sm:$0xff]
    %v1018 = vld [vmem:[#allocation5 + $0x1d78] sm:$0xff]
    %v1019 = vld [vmem:[#allocation5 + $0x1d80] sm:$0xff]
    %v1020 = vld [vmem:[#allocation5 + $0x1d88] sm:$0xff]
    %v1021 = vld [vmem:[#allocation5 + $0x1d90] sm:$0xff]
    %v1022 = vld [vmem:[#allocation5 + $0x1d98] sm:$0xff]
    %v1023 = vld [vmem:[#allocation5 + $0x1da0] sm:$0xff]
    %v1024 = vld [vmem:[#allocation5 + $0x1da8] sm:$0xff]
    %v1025 = vld [vmem:[#allocation5 + $0x1db0] sm:$0xff]
    %v1026 = vld [vmem:[#allocation5 + $0x1db8] sm:$0xff]
    %v1027 = vld [vmem:[#allocation5 + $0x1dc0] sm:$0xff]
    %v1028 = vld [vmem:[#allocation5 + $0x1dc8] sm:$0xff]
    %v1029 = vld [vmem:[#allocation5 + $0x1dd0] sm:$0xff]
    %v1030 = vld [vmem:[#allocation5 + $0x1dd8] sm:$0xff]
    %v1031 = vld [vmem:[#allocation5 + $0x1de0] sm:$0xff]
    %v1032 = vld [vmem:[#allocation5 + $0x1de8] sm:$0xff]
    %v1033 = vld [vmem:[#allocation5 + $0x1df0] sm:$0xff]
    %v1034 = vld [vmem:[#allocation5 + $0x1df8] sm:$0xff]
    %v1035 = vld [vmem:[#allocation5 + $0x1e00] sm:$0xff]
    %v1036 = vld [vmem:[#allocation5 + $0x1e08] sm:$0xff]
    %v1037 = vld [vmem:[#allocation5 + $0x1e10] sm:$0xff]
    %v1038 = vld [vmem:[#allocation5 + $0x1e18] sm:$0xff]
    %v1039 = vld [vmem:[#allocation5 + $0x1e20] sm:$0xff]
    %v1040 = vld [vmem:[#allocation5 + $0x1e28] sm:$0xff]
    %v1041 = vld [vmem:[#allocation5 + $0x1e30] sm:$0xff]
    %v1042 = vld [vmem:[#allocation5 + $0x1e38] sm:$0xff]
    %v1043 = vld [vmem:[#allocation5 + $0x1e40] sm:$0xff]
    %v1044 = vld [vmem:[#allocation5 + $0x1e48] sm:$0xff]
    %v1045 = vld [vmem:[#allocation5 + $0x1e50] sm:$0xff]
    %v1046 = vld [vmem:[#allocation5 + $0x1e58] sm:$0xff]
    %v1047 = vld [vmem:[#allocation5 + $0x1e60] sm:$0xff]
    %v1048 = vld [vmem:[#allocation5 + $0x1e68] sm:$0xff]
    %v1049 = vld [vmem:[#allocation5 + $0x1e70] sm:$0xff]
    %v1050 = vld [vmem:[#allocation5 + $0x1e78] sm:$0xff]
    %v1051 = vld [vmem:[#allocation5 + $0x1e80] sm:$0xff]
    %v1052 = vld [vmem:[#allocation5 + $0x1e88] sm:$0xff]
    %v1053 = vld [vmem:[#allocation5 + $0x1e90] sm:$0xff]
    %v1054 = vld [vmem:[#allocation5 + $0x1e98] sm:$0xff]
    %v1055 = vld [vmem:[#allocation5 + $0x1ea0] sm:$0xff]
    %v1056 = vld [vmem:[#allocation5 + $0x1ea8] sm:$0xff]
    %v1057 = vld [vmem:[#allocation5 + $0x1eb0] sm:$0xff]
    %v1058 = vld [vmem:[#allocation5 + $0x1eb8] sm:$0xff]
    %v1059 = vld [vmem:[#allocation5 + $0x1ec0] sm:$0xff]
    %v1060 = vld [vmem:[#allocation5 + $0x1ec8] sm:$0xff]
    %v1061 = vld [vmem:[#allocation5 + $0x1ed0] sm:$0xff]
    %v1062 = vld [vmem:[#allocation5 + $0x1ed8] sm:$0xff]
    %v1063 = vld [vmem:[#allocation5 + $0x1ee0] sm:$0xff]
    %v1064 = vld [vmem:[#allocation5 + $0x1ee8] sm:$0xff]
    %v1065 = vld [vmem:[#allocation5 + $0x1ef0] sm:$0xff]
    %v1066 = vld [vmem:[#allocation5 + $0x1ef8] sm:$0xff]
    %v1067 = vld [vmem:[#allocation5 + $0x1f00] sm:$0xff]
    %v1068 = vld [vmem:[#allocation5 + $0x1f08] sm:$0xff]
    %v1069 = vld [vmem:[#allocation5 + $0x1f10] sm:$0xff]
    %v1070 = vld [vmem:[#allocation5 + $0x1f18] sm:$0xff]
    %v1071 = vld [vmem:[#allocation5 + $0x1f20] sm:$0xff]
    %v1072 = vld [vmem:[#allocation5 + $0x1f28] sm:$0xff]
    %v1073 = vld [vmem:[#allocation5 + $0x1f30] sm:$0xff]
    %v1074 = vld [vmem:[#allocation5 + $0x1f38] sm:$0xff]
    %v1075 = vld [vmem:[#allocation5 + $0x1f40] sm:$0xff]
    %v1076 = vld [vmem:[#allocation5 + $0x1f48] sm:$0xff]
    %v1077 = vld [vmem:[#allocation5 + $0x1f50] sm:$0xff]
    %v1078 = vld [vmem:[#allocation5 + $0x1f58] sm:$0xff]
    %v1079 = vld [vmem:[#allocation5 + $0x1f60] sm:$0xff]
    %v1080 = vld [vmem:[#allocation5 + $0x1f68] sm:$0xff]
    %v1081 = vld [vmem:[#allocation5 + $0x1f70] sm:$0xff]
    %v1082 = vld [vmem:[#allocation5 + $0x1f78] sm:$0xff]
    %v1083 = vld [vmem:[#allocation5 + $0x1f80] sm:$0xff]
    %v1084 = vld [vmem:[#allocation5 + $0x1f88] sm:$0xff]
    %v1085 = vld [vmem:[#allocation5 + $0x1f90] sm:$0xff]
    %v1086 = vld [vmem:[#allocation5 + $0x1f98] sm:$0xff]
    %v1087 = vld [vmem:[#allocation5 + $0x1fa0] sm:$0xff]
    %v1088 = vld [vmem:[#allocation5 + $0x1fa8] sm:$0xff]
    %v1089 = vld [vmem:[#allocation5 + $0x1fb0] sm:$0xff]
    %v1090 = vld [vmem:[#allocation5 + $0x1fb8] sm:$0xff]
    %v1091 = vld [vmem:[#allocation5 + $0x1fc0] sm:$0xff]
    %v1092 = vld [vmem:[#allocation5 + $0x1fc8] sm:$0xff]
    %v1093 = vld [vmem:[#allocation5 + $0x1fd0] sm:$0xff]
    %v1094 = vld [vmem:[#allocation5 + $0x1fd8] sm:$0xff]
    %v1095 = vld [vmem:[#allocation5 + $0x1fe0] sm:$0xff]
    %v1096 = vld [vmem:[#allocation5 + $0x1fe8] sm:$0xff]
    %v1097 = vld [vmem:[#allocation5 + $0x1ff0] sm:$0xff]
    %v1098 = vld [vmem:[#allocation5 + $0x1ff8] sm:$0xff]
    %1099 = vmatprep.subr.mxu0 %v196
    %1100 = vmatpush1.xpose.msra.mxu0 %v195
    %1101 = vmatprep.subr.mxu0 %v188
    %1102 = vmatpush1.xpose.msra.mxu0 %v187
    %1103 = vmatprep.subr.mxu0 %v180
    %1104 = vmatpush1.xpose.msra.mxu0 %v179
    %1105 = vmatprep.subr.mxu0 %v172
    %1106 = vmatpush1.xpose.msra.mxu0 %v171
    %1107 = vmatprep.subr.mxu0 %v164
    %1108 = vmatpush1.xpose.msra.mxu0 %v163
    %1109 = vmatprep.subr.mxu0 %v156
    %1110 = vmatpush1.xpose.msra.mxu0 %v155
    %1111 = vmatprep.subr.mxu0 %v148
    %1112 = vmatpush1.xpose.msra.mxu0 %v147
    %1113 = vmatprep.subr.mxu0 %v140
    %1114 = vmatpush1.xpose.msra.mxu0 %v139
    %1115 = vmatprep.subr.mxu0 %v132
    %1116 = vmatpush1.xpose.msra.mxu0 %v131
    %1117 = vmatprep.subr.mxu0 %v124
    %1118 = vmatpush1.xpose.msra.mxu0 %v123
    %1119 = vmatprep.subr.mxu0 %v116
    %1120 = vmatpush1.xpose.msra.mxu0 %v115
    %1121 = vmatprep.subr.mxu0 %v108
    %1122 = vmatpush1.xpose.msra.mxu0 %v107
    %1123 = vmatprep.subr.mxu0 %v100
    %1124 = vmatpush1.xpose.msra.mxu0 %v99
    %1125 = vmatprep.subr.mxu0 %v92
    %1126 = vmatpush1.xpose.msra.mxu0 %v91
    %1127 = vmatprep.subr.mxu0 %v84
    %1128 = vmatpush1.xpose.msra.mxu0 %v83
    %1129 = vmatprep.subr.mxu0 %v76
    %1130 = vmatpush1.xpose.msra.mxu0 %v75
    %1131 = vmatprep.subr.mxu0 %v324
    %1132 = vmatpush2.xpose.msra.mxu0 %v323
    %1133 = vmatprep.subr.mxu0 %v316
    %1134 = vmatpush2.xpose.msra.mxu0 %v315
    %1135 = vmatprep.subr.mxu0 %v308
    %1136 = vmatpush2.xpose.msra.mxu0 %v307
    %1137 = vmatprep.subr.mxu0 %v300
    %1138 = vmatpush2.xpose.msra.mxu0 %v299
    %1139 = vmatprep.subr.mxu0 %v292
    %1140 = vmatpush2.xpose.msra.mxu0 %v291
    %1141 = vmatprep.subr.mxu0 %v284
    %1142 = vmatpush2.xpose.msra.mxu0 %v283
    %1143 = vmatprep.subr.mxu0 %v276
    %1144 = vmatpush2.xpose.msra.mxu0 %v275
    %1145 = vmatprep.subr.mxu0 %v268
    %1146 = vmatpush2.xpose.msra.mxu0 %v267
    %1147 = vmatprep.subr.mxu0 %v260
    %1148 = vmatpush2.xpose.msra.mxu0 %v259
    %1149 = vmatprep.subr.mxu0 %v252
    %1150 = vmatpush2.xpose.msra.mxu0 %v251
    %1151 = vmatprep.subr.mxu0 %v244
    %1152 = vmatpush2.xpose.msra.mxu0 %v243
    %1153 = vmatprep.subr.mxu0 %v236
    %1154 = vmatpush2.xpose.msra.mxu0 %v235
    %1155 = vmatprep.subr.mxu0 %v228
    %1156 = vmatpush2.xpose.msra.mxu0 %v227
    %1157 = vmatprep.subr.mxu0 %v220
    %1158 = vmatpush2.xpose.msra.mxu0 %v219
    %1159 = vmatprep.subr.mxu0 %v212
    %1160 = vmatpush2.xpose.msra.mxu0 %v211
    %1161 = vmatprep.subr.mxu0 %v204
    %1162 = vmatpush2.xpose.msra.mxu0 %v203
    %1163 = vmatprep.mubr.f32.mxu0 %v68
    %1164 = vmatmul.mubr.f32.gmra.mxu0 %v67
    %v1165 = vpop.f32.mrf.mxu0
    %v1166 = vadd.f32 0.0, %v1165
    %v1167 = vpop.f32.mrf.mxu0
    %v1168 = vadd.f32 0.0, %v1167
    %1169 = vdwg.mxu0
    %1170 = vmatprep.subr.mxu0 %v198
    %1171 = vmatpush1.xpose.msra.mxu0 %v197
    %1172 = vmatprep.subr.mxu0 %v190
    %1173 = vmatpush1.xpose.msra.mxu0 %v189
    %1174 = vmatprep.subr.mxu0 %v182
    %1175 = vmatpush1.xpose.msra.mxu0 %v181
    %1176 = vmatprep.subr.mxu0 %v174
    %1177 = vmatpush1.xpose.msra.mxu0 %v173
    %1178 = vmatprep.subr.mxu0 %v166
    %1179 = vmatpush1.xpose.msra.mxu0 %v165
    %1180 = vmatprep.subr.mxu0 %v158
    %1181 = vmatpush1.xpose.msra.mxu0 %v157
    %1182 = vmatprep.subr.mxu0 %v150
    %1183 = vmatpush1.xpose.msra.mxu0 %v149
    %1184 = vmatprep.subr.mxu0 %v142
    %1185 = vmatpush1.xpose.msra.mxu0 %v141
    %1186 = vmatprep.subr.mxu0 %v134
    %1187 = vmatpush1.xpose.msra.mxu0 %v133
    %1188 = vmatprep.subr.mxu0 %v126
    %1189 = vmatpush1.xpose.msra.mxu0 %v125
    %1190 = vmatprep.subr.mxu0 %v118
    %1191 = vmatpush1.xpose.msra.mxu0 %v117
    %1192 = vmatprep.subr.mxu0 %v110
    %1193 = vmatpush1.xpose.msra.mxu0 %v109
    %1194 = vmatprep.subr.mxu0 %v102
    %1195 = vmatpush1.xpose.msra.mxu0 %v101
    %1196 = vmatprep.subr.mxu0 %v94
    %1197 = vmatpush1.xpose.msra.mxu0 %v93
    %1198 = vmatprep.subr.mxu0 %v86
    %1199 = vmatpush1.xpose.msra.mxu0 %v85
    %1200 = vmatprep.subr.mxu0 %v78
    %1201 = vmatpush1.xpose.msra.mxu0 %v77
    %1202 = vmatprep.subr.mxu0 %v326
    %1203 = vmatpush2.xpose.msra.mxu0 %v325
    %1204 = vmatprep.subr.mxu0 %v318
    %1205 = vmatpush2.xpose.msra.mxu0 %v317
    %1206 = vmatprep.subr.mxu0 %v310
    %1207 = vmatpush2.xpose.msra.mxu0 %v309
    %1208 = vmatprep.subr.mxu0 %v302
    %1209 = vmatpush2.xpose.msra.mxu0 %v301
    %1210 = vmatprep.subr.mxu0 %v294
    %1211 = vmatpush2.xpose.msra.mxu0 %v293
    %1212 = vmatprep.subr.mxu0 %v286
    %1213 = vmatpush2.xpose.msra.mxu0 %v285
    %1214 = vmatprep.subr.mxu0 %v278
    %1215 = vmatpush2.xpose.msra.mxu0 %v277
    %1216 = vmatprep.subr.mxu0 %v270
    %1217 = vmatpush2.xpose.msra.mxu0 %v269
    %1218 = vmatprep.subr.mxu0 %v262
    %1219 = vmatpush2.xpose.msra.mxu0 %v261
    %1220 = vmatprep.subr.mxu0 %v254
    %1221 = vmatpush2.xpose.msra.mxu0 %v253
    %1222 = vmatprep.subr.mxu0 %v246
    %1223 = vmatpush2.xpose.msra.mxu0 %v245
    %1224 = vmatprep.subr.mxu0 %v238
    %1225 = vmatpush2.xpose.msra.mxu0 %v237
    %1226 = vmatprep.subr.mxu0 %v230
    %1227 = vmatpush2.xpose.msra.mxu0 %v229
    %1228 = vmatprep.subr.mxu0 %v222
    %1229 = vmatpush2.xpose.msra.mxu0 %v221
    %1230 = vmatprep.subr.mxu0 %v214
    %1231 = vmatpush2.xpose.msra.mxu0 %v213
    %1232 = vmatprep.subr.mxu0 %v206
    %1233 = vmatpush2.xpose.msra.mxu0 %v205
    %1234 = vmatprep.mubr.f32.mxu0 %v70
    %1235 = vmatmul.mubr.f32.gmra.mxu0 %v69
    %v1236 = vpop.f32.mrf.mxu0
    %v1237 = vadd.f32 %v1166, %v1236
    %v1238 = vpop.f32.mrf.mxu0
    %v1239 = vadd.f32 %v1168, %v1238
    %1240 = vdwg.mxu0
    %1241 = vmatprep.subr.mxu0 %v200
    %1242 = vmatpush1.xpose.msra.mxu0 %v199
    %1243 = vmatprep.subr.mxu0 %v192
    %1244 = vmatpush1.xpose.msra.mxu0 %v191
    %1245 = vmatprep.subr.mxu0 %v184
    %1246 = vmatpush1.xpose.msra.mxu0 %v183
    %1247 = vmatprep.subr.mxu0 %v176
    %1248 = vmatpush1.xpose.msra.mxu0 %v175
    %1249 = vmatprep.subr.mxu0 %v168
    %1250 = vmatpush1.xpose.msra.mxu0 %v167
    %1251 = vmatprep.subr.mxu0 %v160
    %1252 = vmatpush1.xpose.msra.mxu0 %v159
    %1253 = vmatprep.subr.mxu0 %v152
    %1254 = vmatpush1.xpose.msra.mxu0 %v151
    %1255 = vmatprep.subr.mxu0 %v144
    %1256 = vmatpush1.xpose.msra.mxu0 %v143
    %1257 = vmatprep.subr.mxu0 %v136
    %1258 = vmatpush1.xpose.msra.mxu0 %v135
    %1259 = vmatprep.subr.mxu0 %v128
    %1260 = vmatpush1.xpose.msra.mxu0 %v127
    %1261 = vmatprep.subr.mxu0 %v120
    %1262 = vmatpush1.xpose.msra.mxu0 %v119
    %1263 = vmatprep.subr.mxu0 %v112
    %1264 = vmatpush1.xpose.msra.mxu0 %v111
    %1265 = vmatprep.subr.mxu0 %v104
    %1266 = vmatpush1.xpose.msra.mxu0 %v103
    %1267 = vmatprep.subr.mxu0 %v96
    %1268 = vmatpush1.xpose.msra.mxu0 %v95
    %1269 = vmatprep.subr.mxu0 %v88
    %1270 = vmatpush1.xpose.msra.mxu0 %v87
    %1271 = vmatprep.subr.mxu0 %v80
    %1272 = vmatpush1.xpose.msra.mxu0 %v79
    %1273 = vmatprep.subr.mxu0 %v328
    %1274 = vmatpush2.xpose.msra.mxu0 %v327
    %1275 = vmatprep.subr.mxu0 %v320
    %1276 = vmatpush2.xpose.msra.mxu0 %v319
    %1277 = vmatprep.subr.mxu0 %v312
    %1278 = vmatpush2.xpose.msra.mxu0 %v311
    %1279 = vmatprep.subr.mxu0 %v304
    %1280 = vmatpush2.xpose.msra.mxu0 %v303
    %1281 = vmatprep.subr.mxu0 %v296
    %1282 = vmatpush2.xpose.msra.mxu0 %v295
    %1283 = vmatprep.subr.mxu0 %v288
    %1284 = vmatpush2.xpose.msra.mxu0 %v287
    %1285 = vmatprep.subr.mxu0 %v280
    %1286 = vmatpush2.xpose.msra.mxu0 %v279
    %1287 = vmatprep.subr.mxu0 %v272
    %1288 = vmatpush2.xpose.msra.mxu0 %v271
    %1289 = vmatprep.subr.mxu0 %v264
    %1290 = vmatpush2.xpose.msra.mxu0 %v263
    %1291 = vmatprep.subr.mxu0 %v256
    %1292 = vmatpush2.xpose.msra.mxu0 %v255
    %1293 = vmatprep.subr.mxu0 %v248
    %1294 = vmatpush2.xpose.msra.mxu0 %v247
    %1295 = vmatprep.subr.mxu0 %v240
    %1296 = vmatpush2.xpose.msra.mxu0 %v239
    %1297 = vmatprep.subr.mxu0 %v232
    %1298 = vmatpush2.xpose.msra.mxu0 %v231
    %1299 = vmatprep.subr.mxu0 %v224
    %1300 = vmatpush2.xpose.msra.mxu0 %v223
    %1301 = vmatprep.subr.mxu0 %v216
    %1302 = vmatpush2.xpose.msra.mxu0 %v215
    %1303 = vmatprep.subr.mxu0 %v208
    %1304 = vmatpush2.xpose.msra.mxu0 %v207
    %1305 = vmatprep.mubr.f32.mxu0 %v72
    %1306 = vmatmul.mubr.f32.gmra.mxu0 %v71
    %v1307 = vpop.f32.mrf.mxu0
    %v1308 = vadd.f32 %v1237, %v1307
    %v1309 = vpop.f32.mrf.mxu0
    %v1310 = vadd.f32 %v1239, %v1309
    %1311 = vdwg.mxu0
    %1312 = vmatprep.subr.mxu0 %v202
    %1313 = vmatpush1.xpose.msra.mxu0 %v201
    %1314 = vmatprep.subr.mxu0 %v194
    %1315 = vmatpush1.xpose.msra.mxu0 %v193
    %1316 = vmatprep.subr.mxu0 %v186
    %1317 = vmatpush1.xpose.msra.mxu0 %v185
    %1318 = vmatprep.subr.mxu0 %v178
    %1319 = vmatpush1.xpose.msra.mxu0 %v177
    %1320 = vmatprep.subr.mxu0 %v170
    %1321 = vmatpush1.xpose.msra.mxu0 %v169
    %1322 = vmatprep.subr.mxu0 %v162
    %1323 = vmatpush1.xpose.msra.mxu0 %v161
    %1324 = vmatprep.subr.mxu0 %v154
    %1325 = vmatpush1.xpose.msra.mxu0 %v153
    %1326 = vmatprep.subr.mxu0 %v146
    %1327 = vmatpush1.xpose.msra.mxu0 %v145
    %1328 = vmatprep.subr.mxu0 %v138
    %1329 = vmatpush1.xpose.msra.mxu0 %v137
    %1330 = vmatprep.subr.mxu0 %v130
    %1331 = vmatpush1.xpose.msra.mxu0 %v129
    %1332 = vmatprep.subr.mxu0 %v122
    %1333 = vmatpush1.xpose.msra.mxu0 %v121
    %1334 = vmatprep.subr.mxu0 %v114
    %1335 = vmatpush1.xpose.msra.mxu0 %v113
    %1336 = vmatprep.subr.mxu0 %v106
    %1337 = vmatpush1.xpose.msra.mxu0 %v105
    %1338 = vmatprep.subr.mxu0 %v98
    %1339 = vmatpush1.xpose.msra.mxu0 %v97
    %1340 = vmatprep.subr.mxu0 %v90
    %1341 = vmatpush1.xpose.msra.mxu0 %v89
    %1342 = vmatprep.subr.mxu0 %v82
    %1343 = vmatpush1.xpose.msra.mxu0 %v81
    %1344 = vmatprep.subr.mxu0 %v330
    %1345 = vmatpush2.xpose.msra.mxu0 %v329
    %1346 = vmatprep.subr.mxu0 %v322
    %1347 = vmatpush2.xpose.msra.mxu0 %v321
    %1348 = vmatprep.subr.mxu0 %v314
    %1349 = vmatpush2.xpose.msra.mxu0 %v313
    %1350 = vmatprep.subr.mxu0 %v306
    %1351 = vmatpush2.xpose.msra.mxu0 %v305
    %1352 = vmatprep.subr.mxu0 %v298
    %1353 = vmatpush2.xpose.msra.mxu0 %v297
    %1354 = vmatprep.subr.mxu0 %v290
    %1355 = vmatpush2.xpose.msra.mxu0 %v289
    %1356 = vmatprep.subr.mxu0 %v282
    %1357 = vmatpush2.xpose.msra.mxu0 %v281
    %1358 = vmatprep.subr.mxu0 %v274
    %1359 = vmatpush2.xpose.msra.mxu0 %v273
    %1360 = vmatprep.subr.mxu0 %v266
    %1361 = vmatpush2.xpose.msra.mxu0 %v265
    %1362 = vmatprep.subr.mxu0 %v258
    %1363 = vmatpush2.xpose.msra.mxu0 %v257
    %1364 = vmatprep.subr.mxu0 %v250
    %1365 = vmatpush2.xpose.msra.mxu0 %v249
    %1366 = vmatprep.subr.mxu0 %v242
    %1367 = vmatpush2.xpose.msra.mxu0 %v241
    %1368 = vmatprep.subr.mxu0 %v234
    %1369 = vmatpush2.xpose.msra.mxu0 %v233
    %1370 = vmatprep.subr.mxu0 %v226
    %1371 = vmatpush2.xpose.msra.mxu0 %v225
    %1372 = vmatprep.subr.mxu0 %v218
    %1373 = vmatpush2.xpose.msra.mxu0 %v217
    %1374 = vmatprep.subr.mxu0 %v210
    %1375 = vmatpush2.xpose.msra.mxu0 %v209
    %1376 = vmatprep.mubr.f32.mxu0 %v74
    %1377 = vmatmul.mubr.f32.gmra.mxu0 %v73
    %v1378 = vpop.f32.mrf.mxu0
    %v1379 = vadd.f32 %v1308, %v1378
    %v1380 = vpop.f32.mrf.mxu0
    %v1381 = vadd.f32 %v1310, %v1380
    %1382 = vdwg.mxu0
    %1383 = vmatprep.subr.mxu0 %v452
    %1384 = vmatpush1.xpose.msra.mxu0 %v451
    %1385 = vmatprep.subr.mxu0 %v444
    %1386 = vmatpush1.xpose.msra.mxu0 %v443
    %1387 = vmatprep.subr.mxu0 %v436
    %1388 = vmatpush1.xpose.msra.mxu0 %v435
    %1389 = vmatprep.subr.mxu0 %v428
    %1390 = vmatpush1.xpose.msra.mxu0 %v427
    %1391 = vmatprep.subr.mxu0 %v420
    %1392 = vmatpush1.xpose.msra.mxu0 %v419
    %1393 = vmatprep.subr.mxu0 %v412
    %1394 = vmatpush1.xpose.msra.mxu0 %v411
    %1395 = vmatprep.subr.mxu0 %v404
    %1396 = vmatpush1.xpose.msra.mxu0 %v403
    %1397 = vmatprep.subr.mxu0 %v396
    %1398 = vmatpush1.xpose.msra.mxu0 %v395
    %1399 = vmatprep.subr.mxu0 %v388
    %1400 = vmatpush1.xpose.msra.mxu0 %v387
    %1401 = vmatprep.subr.mxu0 %v380
    %1402 = vmatpush1.xpose.msra.mxu0 %v379
    %1403 = vmatprep.subr.mxu0 %v372
    %1404 = vmatpush1.xpose.msra.mxu0 %v371
    %1405 = vmatprep.subr.mxu0 %v364
    %1406 = vmatpush1.xpose.msra.mxu0 %v363
    %1407 = vmatprep.subr.mxu0 %v356
    %1408 = vmatpush1.xpose.msra.mxu0 %v355
    %1409 = vmatprep.subr.mxu0 %v348
    %1410 = vmatpush1.xpose.msra.mxu0 %v347
    %1411 = vmatprep.subr.mxu0 %v340
    %1412 = vmatpush1.xpose.msra.mxu0 %v339
    %1413 = vmatprep.subr.mxu0 %v332
    %1414 = vmatpush1.xpose.msra.mxu0 %v331
    %1415 = vmatprep.subr.mxu0 %v580
    %1416 = vmatpush2.xpose.msra.mxu0 %v579
    %1417 = vmatprep.subr.mxu0 %v572
    %1418 = vmatpush2.xpose.msra.mxu0 %v571
    %1419 = vmatprep.subr.mxu0 %v564
    %1420 = vmatpush2.xpose.msra.mxu0 %v563
    %1421 = vmatprep.subr.mxu0 %v556
    %1422 = vmatpush2.xpose.msra.mxu0 %v555
    %1423 = vmatprep.subr.mxu0 %v548
    %1424 = vmatpush2.xpose.msra.mxu0 %v547
    %1425 = vmatprep.subr.mxu0 %v540
    %1426 = vmatpush2.xpose.msra.mxu0 %v539
    %1427 = vmatprep.subr.mxu0 %v532
    %1428 = vmatpush2.xpose.msra.mxu0 %v531
    %1429 = vmatprep.subr.mxu0 %v524
    %1430 = vmatpush2.xpose.msra.mxu0 %v523
    %1431 = vmatprep.subr.mxu0 %v516
    %1432 = vmatpush2.xpose.msra.mxu0 %v515
    %1433 = vmatprep.subr.mxu0 %v508
    %1434 = vmatpush2.xpose.msra.mxu0 %v507
    %1435 = vmatprep.subr.mxu0 %v500
    %1436 = vmatpush2.xpose.msra.mxu0 %v499
    %1437 = vmatprep.subr.mxu0 %v492
    %1438 = vmatpush2.xpose.msra.mxu0 %v491
    %1439 = vmatprep.subr.mxu0 %v484
    %1440 = vmatpush2.xpose.msra.mxu0 %v483
    %1441 = vmatprep.subr.mxu0 %v476
    %1442 = vmatpush2.xpose.msra.mxu0 %v475
    %1443 = vmatprep.subr.mxu0 %v468
    %1444 = vmatpush2.xpose.msra.mxu0 %v467
    %1445 = vmatprep.subr.mxu0 %v460
    %1446 = vmatpush2.xpose.msra.mxu0 %v459
    %1447 = vmatprep.mubr.f32.mxu0 %v68
    %1448 = vmatmul.mubr.f32.gmra.mxu0 %v67
    %v1449 = vpop.f32.mrf.mxu0
    %v1450 = vadd.f32 0.0, %v1449
    %v1451 = vpop.f32.mrf.mxu0
    %v1452 = vadd.f32 0.0, %v1451
    %1453 = vdwg.mxu0
    %1454 = vmatprep.subr.mxu0 %v454
    %1455 = vmatpush1.xpose.msra.mxu0 %v453
    %1456 = vmatprep.subr.mxu0 %v446
    %1457 = vmatpush1.xpose.msra.mxu0 %v445
    %1458 = vmatprep.subr.mxu0 %v438
    %1459 = vmatpush1.xpose.msra.mxu0 %v437
    %1460 = vmatprep.subr.mxu0 %v430
    %1461 = vmatpush1.xpose.msra.mxu0 %v429
    %1462 = vmatprep.subr.mxu0 %v422
    %1463 = vmatpush1.xpose.msra.mxu0 %v421
    %1464 = vmatprep.subr.mxu0 %v414
    %1465 = vmatpush1.xpose.msra.mxu0 %v413
    %1466 = vmatprep.subr.mxu0 %v406
    %1467 = vmatpush1.xpose.msra.mxu0 %v405
    %1468 = vmatprep.subr.mxu0 %v398
    %1469 = vmatpush1.xpose.msra.mxu0 %v397
    %1470 = vmatprep.subr.mxu0 %v390
    %1471 = vmatpush1.xpose.msra.mxu0 %v389
    %1472 = vmatprep.subr.mxu0 %v382
    %1473 = vmatpush1.xpose.msra.mxu0 %v381
    %1474 = vmatprep.subr.mxu0 %v374
    %1475 = vmatpush1.xpose.msra.mxu0 %v373
    %1476 = vmatprep.subr.mxu0 %v366
    %1477 = vmatpush1.xpose.msra.mxu0 %v365
    %1478 = vmatprep.subr.mxu0 %v358
    %1479 = vmatpush1.xpose.msra.mxu0 %v357
    %1480 = vmatprep.subr.mxu0 %v350
    %1481 = vmatpush1.xpose.msra.mxu0 %v349
    %1482 = vmatprep.subr.mxu0 %v342
    %1483 = vmatpush1.xpose.msra.mxu0 %v341
    %1484 = vmatprep.subr.mxu0 %v334
    %1485 = vmatpush1.xpose.msra.mxu0 %v333
    %1486 = vmatprep.subr.mxu0 %v582
    %1487 = vmatpush2.xpose.msra.mxu0 %v581
    %1488 = vmatprep.subr.mxu0 %v574
    %1489 = vmatpush2.xpose.msra.mxu0 %v573
    %1490 = vmatprep.subr.mxu0 %v566
    %1491 = vmatpush2.xpose.msra.mxu0 %v565
    %1492 = vmatprep.subr.mxu0 %v558
    %1493 = vmatpush2.xpose.msra.mxu0 %v557
    %1494 = vmatprep.subr.mxu0 %v550
    %1495 = vmatpush2.xpose.msra.mxu0 %v549
    %1496 = vmatprep.subr.mxu0 %v542
    %1497 = vmatpush2.xpose.msra.mxu0 %v541
    %1498 = vmatprep.subr.mxu0 %v534
    %1499 = vmatpush2.xpose.msra.mxu0 %v533
    %1500 = vmatprep.subr.mxu0 %v526
    %1501 = vmatpush2.xpose.msra.mxu0 %v525
    %1502 = vmatprep.subr.mxu0 %v518
    %1503 = vmatpush2.xpose.msra.mxu0 %v517
    %1504 = vmatprep.subr.mxu0 %v510
    %1505 = vmatpush2.xpose.msra.mxu0 %v509
    %1506 = vmatprep.subr.mxu0 %v502
    %1507 = vmatpush2.xpose.msra.mxu0 %v501
    %1508 = vmatprep.subr.mxu0 %v494
    %1509 = vmatpush2.xpose.msra.mxu0 %v493
    %1510 = vmatprep.subr.mxu0 %v486
    %1511 = vmatpush2.xpose.msra.mxu0 %v485
    %1512 = vmatprep.subr.mxu0 %v478
    %1513 = vmatpush2.xpose.msra.mxu0 %v477
    %1514 = vmatprep.subr.mxu0 %v470
    %1515 = vmatpush2.xpose.msra.mxu0 %v469
    %1516 = vmatprep.subr.mxu0 %v462
    %1517 = vmatpush2.xpose.msra.mxu0 %v461
    %1518 = vmatprep.mubr.f32.mxu0 %v70
    %1519 = vmatmul.mubr.f32.gmra.mxu0 %v69
    %v1520 = vpop.f32.mrf.mxu0
    %v1521 = vadd.f32 %v1450, %v1520
    %v1522 = vpop.f32.mrf.mxu0
    %v1523 = vadd.f32 %v1452, %v1522
    %1524 = vdwg.mxu0
    %1525 = vmatprep.subr.mxu0 %v456
    %1526 = vmatpush1.xpose.msra.mxu0 %v455
    %1527 = vmatprep.subr.mxu0 %v448
    %1528 = vmatpush1.xpose.msra.mxu0 %v447
    %1529 = vmatprep.subr.mxu0 %v440
    %1530 = vmatpush1.xpose.msra.mxu0 %v439
    %1531 = vmatprep.subr.mxu0 %v432
    %1532 = vmatpush1.xpose.msra.mxu0 %v431
    %1533 = vmatprep.subr.mxu0 %v424
    %1534 = vmatpush1.xpose.msra.mxu0 %v423
    %1535 = vmatprep.subr.mxu0 %v416
    %1536 = vmatpush1.xpose.msra.mxu0 %v415
    %1537 = vmatprep.subr.mxu0 %v408
    %1538 = vmatpush1.xpose.msra.mxu0 %v407
    %1539 = vmatprep.subr.mxu0 %v400
    %1540 = vmatpush1.xpose.msra.mxu0 %v399
    %1541 = vmatprep.subr.mxu0 %v392
    %1542 = vmatpush1.xpose.msra.mxu0 %v391
    %1543 = vmatprep.subr.mxu0 %v384
    %1544 = vmatpush1.xpose.msra.mxu0 %v383
    %1545 = vmatprep.subr.mxu0 %v376
    %1546 = vmatpush1.xpose.msra.mxu0 %v375
    %1547 = vmatprep.subr.mxu0 %v368
    %1548 = vmatpush1.xpose.msra.mxu0 %v367
    %1549 = vmatprep.subr.mxu0 %v360
    %1550 = vmatpush1.xpose.msra.mxu0 %v359
    %1551 = vmatprep.subr.mxu0 %v352
    %1552 = vmatpush1.xpose.msra.mxu0 %v351
    %1553 = vmatprep.subr.mxu0 %v344
    %1554 = vmatpush1.xpose.msra.mxu0 %v343
    %1555 = vmatprep.subr.mxu0 %v336
    %1556 = vmatpush1.xpose.msra.mxu0 %v335
    %1557 = vmatprep.subr.mxu0 %v584
    %1558 = vmatpush2.xpose.msra.mxu0 %v583
    %1559 = vmatprep.subr.mxu0 %v576
    %1560 = vmatpush2.xpose.msra.mxu0 %v575
    %1561 = vmatprep.subr.mxu0 %v568
    %1562 = vmatpush2.xpose.msra.mxu0 %v567
    %1563 = vmatprep.subr.mxu0 %v560
    %1564 = vmatpush2.xpose.msra.mxu0 %v559
    %1565 = vmatprep.subr.mxu0 %v552
    %1566 = vmatpush2.xpose.msra.mxu0 %v551
    %1567 = vmatprep.subr.mxu0 %v544
    %1568 = vmatpush2.xpose.msra.mxu0 %v543
    %1569 = vmatprep.subr.mxu0 %v536
    %1570 = vmatpush2.xpose.msra.mxu0 %v535
    %1571 = vmatprep.subr.mxu0 %v528
    %1572 = vmatpush2.xpose.msra.mxu0 %v527
    %1573 = vmatprep.subr.mxu0 %v520
    %1574 = vmatpush2.xpose.msra.mxu0 %v519
    %1575 = vmatprep.subr.mxu0 %v512
    %1576 = vmatpush2.xpose.msra.mxu0 %v511
    %1577 = vmatprep.subr.mxu0 %v504
    %1578 = vmatpush2.xpose.msra.mxu0 %v503
    %1579 = vmatprep.subr.mxu0 %v496
    %1580 = vmatpush2.xpose.msra.mxu0 %v495
    %1581 = vmatprep.subr.mxu0 %v488
    %1582 = vmatpush2.xpose.msra.mxu0 %v487
    %1583 = vmatprep.subr.mxu0 %v480
    %1584 = vmatpush2.xpose.msra.mxu0 %v479
    %1585 = vmatprep.subr.mxu0 %v472
    %1586 = vmatpush2.xpose.msra.mxu0 %v471
    %1587 = vmatprep.subr.mxu0 %v464
    %1588 = vmatpush2.xpose.msra.mxu0 %v463
    %1589 = vmatprep.mubr.f32.mxu0 %v72
    %1590 = vmatmul.mubr.f32.gmra.mxu0 %v71
    %v1591 = vpop.f32.mrf.mxu0
    %v1592 = vadd.f32 %v1521, %v1591
    %v1593 = vpop.f32.mrf.mxu0
    %v1594 = vadd.f32 %v1523, %v1593
    %1595 = vdwg.mxu0
    %1596 = vmatprep.subr.mxu0 %v458
    %1597 = vmatpush1.xpose.msra.mxu0 %v457
    %1598 = vmatprep.subr.mxu0 %v450
    %1599 = vmatpush1.xpose.msra.mxu0 %v449
    %1600 = vmatprep.subr.mxu0 %v442
    %1601 = vmatpush1.xpose.msra.mxu0 %v441
    %1602 = vmatprep.subr.mxu0 %v434
    %1603 = vmatpush1.xpose.msra.mxu0 %v433
    %1604 = vmatprep.subr.mxu0 %v426
    %1605 = vmatpush1.xpose.msra.mxu0 %v425
    %1606 = vmatprep.subr.mxu0 %v418
    %1607 = vmatpush1.xpose.msra.mxu0 %v417
    %1608 = vmatprep.subr.mxu0 %v410
    %1609 = vmatpush1.xpose.msra.mxu0 %v409
    %1610 = vmatprep.subr.mxu0 %v402
    %1611 = vmatpush1.xpose.msra.mxu0 %v401
    %1612 = vmatprep.subr.mxu0 %v394
    %1613 = vmatpush1.xpose.msra.mxu0 %v393
    %1614 = vmatprep.subr.mxu0 %v386
    %1615 = vmatpush1.xpose.msra.mxu0 %v385
    %1616 = vmatprep.subr.mxu0 %v378
    %1617 = vmatpush1.xpose.msra.mxu0 %v377
    %1618 = vmatprep.subr.mxu0 %v370
    %1619 = vmatpush1.xpose.msra.mxu0 %v369
    %1620 = vmatprep.subr.mxu0 %v362
    %1621 = vmatpush1.xpose.msra.mxu0 %v361
    %1622 = vmatprep.subr.mxu0 %v354
    %1623 = vmatpush1.xpose.msra.mxu0 %v353
    %1624 = vmatprep.subr.mxu0 %v346
    %1625 = vmatpush1.xpose.msra.mxu0 %v345
    %1626 = vmatprep.subr.mxu0 %v338
    %1627 = vmatpush1.xpose.msra.mxu0 %v337
    %1628 = vmatprep.subr.mxu0 %v586
    %1629 = vmatpush2.xpose.msra.mxu0 %v585
    %1630 = vmatprep.subr.mxu0 %v578
    %1631 = vmatpush2.xpose.msra.mxu0 %v577
    %1632 = vmatprep.subr.mxu0 %v570
    %1633 = vmatpush2.xpose.msra.mxu0 %v569
    %1634 = vmatprep.subr.mxu0 %v562
    %1635 = vmatpush2.xpose.msra.mxu0 %v561
    %1636 = vmatprep.subr.mxu0 %v554
    %1637 = vmatpush2.xpose.msra.mxu0 %v553
    %1638 = vmatprep.subr.mxu0 %v546
    %1639 = vmatpush2.xpose.msra.mxu0 %v545
    %1640 = vmatprep.subr.mxu0 %v538
    %1641 = vmatpush2.xpose.msra.mxu0 %v537
    %1642 = vmatprep.subr.mxu0 %v530
    %1643 = vmatpush2.xpose.msra.mxu0 %v529
    %1644 = vmatprep.subr.mxu0 %v522
    %1645 = vmatpush2.xpose.msra.mxu0 %v521
    %1646 = vmatprep.subr.mxu0 %v514
    %1647 = vmatpush2.xpose.msra.mxu0 %v513
    %1648 = vmatprep.subr.mxu0 %v506
    %1649 = vmatpush2.xpose.msra.mxu0 %v505
    %1650 = vmatprep.subr.mxu0 %v498
    %1651 = vmatpush2.xpose.msra.mxu0 %v497
    %1652 = vmatprep.subr.mxu0 %v490
    %1653 = vmatpush2.xpose.msra.mxu0 %v489
    %1654 = vmatprep.subr.mxu0 %v482
    %1655 = vmatpush2.xpose.msra.mxu0 %v481
    %1656 = vmatprep.subr.mxu0 %v474
    %1657 = vmatpush2.xpose.msra.mxu0 %v473
    %1658 = vmatprep.subr.mxu0 %v466
    %1659 = vmatpush2.xpose.msra.mxu0 %v465
    %1660 = vmatprep.mubr.f32.mxu0 %v74
    %1661 = vmatmul.mubr.f32.gmra.mxu0 %v73
    %v1662 = vpop.f32.mrf.mxu0
    %v1663 = vadd.f32 %v1592, %v1662
    %v1664 = vpop.f32.mrf.mxu0
    %v1665 = vadd.f32 %v1594, %v1664
    %1666 = vdwg.mxu0
    %1667 = vmatprep.subr.mxu0 %v708
    %1668 = vmatpush1.xpose.msra.mxu0 %v707
    %1669 = vmatprep.subr.mxu0 %v700
    %1670 = vmatpush1.xpose.msra.mxu0 %v699
    %1671 = vmatprep.subr.mxu0 %v692
    %1672 = vmatpush1.xpose.msra.mxu0 %v691
    %1673 = vmatprep.subr.mxu0 %v684
    %1674 = vmatpush1.xpose.msra.mxu0 %v683
    %1675 = vmatprep.subr.mxu0 %v676
    %1676 = vmatpush1.xpose.msra.mxu0 %v675
    %1677 = vmatprep.subr.mxu0 %v668
    %1678 = vmatpush1.xpose.msra.mxu0 %v667
    %1679 = vmatprep.subr.mxu0 %v660
    %1680 = vmatpush1.xpose.msra.mxu0 %v659
    %1681 = vmatprep.subr.mxu0 %v652
    %1682 = vmatpush1.xpose.msra.mxu0 %v651
    %1683 = vmatprep.subr.mxu0 %v644
    %1684 = vmatpush1.xpose.msra.mxu0 %v643
    %1685 = vmatprep.subr.mxu0 %v636
    %1686 = vmatpush1.xpose.msra.mxu0 %v635
    %1687 = vmatprep.subr.mxu0 %v628
    %1688 = vmatpush1.xpose.msra.mxu0 %v627
    %1689 = vmatprep.subr.mxu0 %v620
    %1690 = vmatpush1.xpose.msra.mxu0 %v619
    %1691 = vmatprep.subr.mxu0 %v612
    %1692 = vmatpush1.xpose.msra.mxu0 %v611
    %1693 = vmatprep.subr.mxu0 %v604
    %1694 = vmatpush1.xpose.msra.mxu0 %v603
    %1695 = vmatprep.subr.mxu0 %v596
    %1696 = vmatpush1.xpose.msra.mxu0 %v595
    %1697 = vmatprep.subr.mxu0 %v588
    %1698 = vmatpush1.xpose.msra.mxu0 %v587
    %1699 = vmatprep.subr.mxu0 %v836
    %1700 = vmatpush2.xpose.msra.mxu0 %v835
    %1701 = vmatprep.subr.mxu0 %v828
    %1702 = vmatpush2.xpose.msra.mxu0 %v827
    %1703 = vmatprep.subr.mxu0 %v820
    %1704 = vmatpush2.xpose.msra.mxu0 %v819
    %1705 = vmatprep.subr.mxu0 %v812
    %1706 = vmatpush2.xpose.msra.mxu0 %v811
    %1707 = vmatprep.subr.mxu0 %v804
    %1708 = vmatpush2.xpose.msra.mxu0 %v803
    %1709 = vmatprep.subr.mxu0 %v796
    %1710 = vmatpush2.xpose.msra.mxu0 %v795
    %1711 = vmatprep.subr.mxu0 %v788
    %1712 = vmatpush2.xpose.msra.mxu0 %v787
    %1713 = vmatprep.subr.mxu0 %v780
    %1714 = vmatpush2.xpose.msra.mxu0 %v779
    %1715 = vmatprep.subr.mxu0 %v772
    %1716 = vmatpush2.xpose.msra.mxu0 %v771
    %1717 = vmatprep.subr.mxu0 %v764
    %1718 = vmatpush2.xpose.msra.mxu0 %v763
    %1719 = vmatprep.subr.mxu0 %v756
    %1720 = vmatpush2.xpose.msra.mxu0 %v755
    %1721 = vmatprep.subr.mxu0 %v748
    %1722 = vmatpush2.xpose.msra.mxu0 %v747
    %1723 = vmatprep.subr.mxu0 %v740
    %1724 = vmatpush2.xpose.msra.mxu0 %v739
    %1725 = vmatprep.subr.mxu0 %v732
    %1726 = vmatpush2.xpose.msra.mxu0 %v731
    %1727 = vmatprep.subr.mxu0 %v724
    %1728 = vmatpush2.xpose.msra.mxu0 %v723
    %1729 = vmatprep.subr.mxu0 %v716
    %1730 = vmatpush2.xpose.msra.mxu0 %v715
    %1731 = vmatprep.mubr.f32.mxu0 %v68
    %1732 = vmatmul.mubr.f32.gmra.mxu0 %v67
    %v1733 = vpop.f32.mrf.mxu0
    %v1734 = vadd.f32 0.0, %v1733
    %v1735 = vpop.f32.mrf.mxu0
    %v1736 = vadd.f32 0.0, %v1735
    %1737 = vdwg.mxu0
    %1738 = vmatprep.subr.mxu0 %v710
    %1739 = vmatpush1.xpose.msra.mxu0 %v709
    %1740 = vmatprep.subr.mxu0 %v702
    %1741 = vmatpush1.xpose.msra.mxu0 %v701
    %1742 = vmatprep.subr.mxu0 %v694
    %1743 = vmatpush1.xpose.msra.mxu0 %v693
    %1744 = vmatprep.subr.mxu0 %v686
    %1745 = vmatpush1.xpose.msra.mxu0 %v685
    %1746 = vmatprep.subr.mxu0 %v678
    %1747 = vmatpush1.xpose.msra.mxu0 %v677
    %1748 = vmatprep.subr.mxu0 %v670
    %1749 = vmatpush1.xpose.msra.mxu0 %v669
    %1750 = vmatprep.subr.mxu0 %v662
    %1751 = vmatpush1.xpose.msra.mxu0 %v661
    %1752 = vmatprep.subr.mxu0 %v654
    %1753 = vmatpush1.xpose.msra.mxu0 %v653
    %1754 = vmatprep.subr.mxu0 %v646
    %1755 = vmatpush1.xpose.msra.mxu0 %v645
    %1756 = vmatprep.subr.mxu0 %v638
    %1757 = vmatpush1.xpose.msra.mxu0 %v637
    %1758 = vmatprep.subr.mxu0 %v630
    %1759 = vmatpush1.xpose.msra.mxu0 %v629
    %1760 = vmatprep.subr.mxu0 %v622
    %1761 = vmatpush1.xpose.msra.mxu0 %v621
    %1762 = vmatprep.subr.mxu0 %v614
    %1763 = vmatpush1.xpose.msra.mxu0 %v613
    %1764 = vmatprep.subr.mxu0 %v606
    %1765 = vmatpush1.xpose.msra.mxu0 %v605
    %1766 = vmatprep.subr.mxu0 %v598
    %1767 = vmatpush1.xpose.msra.mxu0 %v597
    %1768 = vmatprep.subr.mxu0 %v590
    %1769 = vmatpush1.xpose.msra.mxu0 %v589
    %1770 = vmatprep.subr.mxu0 %v838
    %1771 = vmatpush2.xpose.msra.mxu0 %v837
    %1772 = vmatprep.subr.mxu0 %v830
    %1773 = vmatpush2.xpose.msra.mxu0 %v829
    %1774 = vmatprep.subr.mxu0 %v822
    %1775 = vmatpush2.xpose.msra.mxu0 %v821
    %1776 = vmatprep.subr.mxu0 %v814
    %1777 = vmatpush2.xpose.msra.mxu0 %v813
    %1778 = vmatprep.subr.mxu0 %v806
    %1779 = vmatpush2.xpose.msra.mxu0 %v805
    %1780 = vmatprep.subr.mxu0 %v798
    %1781 = vmatpush2.xpose.msra.mxu0 %v797
    %1782 = vmatprep.subr.mxu0 %v790
    %1783 = vmatpush2.xpose.msra.mxu0 %v789
    %1784 = vmatprep.subr.mxu0 %v782
    %1785 = vmatpush2.xpose.msra.mxu0 %v781
    %1786 = vmatprep.subr.mxu0 %v774
    %1787 = vmatpush2.xpose.msra.mxu0 %v773
    %1788 = vmatprep.subr.mxu0 %v766
    %1789 = vmatpush2.xpose.msra.mxu0 %v765
    %1790 = vmatprep.subr.mxu0 %v758
    %1791 = vmatpush2.xpose.msra.mxu0 %v757
    %1792 = vmatprep.subr.mxu0 %v750
    %1793 = vmatpush2.xpose.msra.mxu0 %v749
    %1794 = vmatprep.subr.mxu0 %v742
    %1795 = vmatpush2.xpose.msra.mxu0 %v741
    %1796 = vmatprep.subr.mxu0 %v734
    %1797 = vmatpush2.xpose.msra.mxu0 %v733
    %1798 = vmatprep.subr.mxu0 %v726
    %1799 = vmatpush2.xpose.msra.mxu0 %v725
    %1800 = vmatprep.subr.mxu0 %v718
    %1801 = vmatpush2.xpose.msra.mxu0 %v717
    %1802 = vmatprep.mubr.f32.mxu0 %v70
    %1803 = vmatmul.mubr.f32.gmra.mxu0 %v69
    %v1804 = vpop.f32.mrf.mxu0
    %v1805 = vadd.f32 %v1734, %v1804
    %v1806 = vpop.f32.mrf.mxu0
    %v1807 = vadd.f32 %v1736, %v1806
    %1808 = vdwg.mxu0
    %1809 = vmatprep.subr.mxu0 %v712
    %1810 = vmatpush1.xpose.msra.mxu0 %v711
    %1811 = vmatprep.subr.mxu0 %v704
    %1812 = vmatpush1.xpose.msra.mxu0 %v703
    %1813 = vmatprep.subr.mxu0 %v696
    %1814 = vmatpush1.xpose.msra.mxu0 %v695
    %1815 = vmatprep.subr.mxu0 %v688
    %1816 = vmatpush1.xpose.msra.mxu0 %v687
    %1817 = vmatprep.subr.mxu0 %v680
    %1818 = vmatpush1.xpose.msra.mxu0 %v679
    %1819 = vmatprep.subr.mxu0 %v672
    %1820 = vmatpush1.xpose.msra.mxu0 %v671
    %1821 = vmatprep.subr.mxu0 %v664
    %1822 = vmatpush1.xpose.msra.mxu0 %v663
    %1823 = vmatprep.subr.mxu0 %v656
    %1824 = vmatpush1.xpose.msra.mxu0 %v655
    %1825 = vmatprep.subr.mxu0 %v648
    %1826 = vmatpush1.xpose.msra.mxu0 %v647
    %1827 = vmatprep.subr.mxu0 %v640
    %1828 = vmatpush1.xpose.msra.mxu0 %v639
    %1829 = vmatprep.subr.mxu0 %v632
    %1830 = vmatpush1.xpose.msra.mxu0 %v631
    %1831 = vmatprep.subr.mxu0 %v624
    %1832 = vmatpush1.xpose.msra.mxu0 %v623
    %1833 = vmatprep.subr.mxu0 %v616
    %1834 = vmatpush1.xpose.msra.mxu0 %v615
    %1835 = vmatprep.subr.mxu0 %v608
    %1836 = vmatpush1.xpose.msra.mxu0 %v607
    %1837 = vmatprep.subr.mxu0 %v600
    %1838 = vmatpush1.xpose.msra.mxu0 %v599
    %1839 = vmatprep.subr.mxu0 %v592
    %1840 = vmatpush1.xpose.msra.mxu0 %v591
    %1841 = vmatprep.subr.mxu0 %v840
    %1842 = vmatpush2.xpose.msra.mxu0 %v839
    %1843 = vmatprep.subr.mxu0 %v832
    %1844 = vmatpush2.xpose.msra.mxu0 %v831
    %1845 = vmatprep.subr.mxu0 %v824
    %1846 = vmatpush2.xpose.msra.mxu0 %v823
    %1847 = vmatprep.subr.mxu0 %v816
    %1848 = vmatpush2.xpose.msra.mxu0 %v815
    %1849 = vmatprep.subr.mxu0 %v808
    %1850 = vmatpush2.xpose.msra.mxu0 %v807
    %1851 = vmatprep.subr.mxu0 %v800
    %1852 = vmatpush2.xpose.msra.mxu0 %v799
    %1853 = vmatprep.subr.mxu0 %v792
    %1854 = vmatpush2.xpose.msra.mxu0 %v791
    %1855 = vmatprep.subr.mxu0 %v784
    %1856 = vmatpush2.xpose.msra.mxu0 %v783
    %1857 = vmatprep.subr.mxu0 %v776
    %1858 = vmatpush2.xpose.msra.mxu0 %v775
    %1859 = vmatprep.subr.mxu0 %v768
    %1860 = vmatpush2.xpose.msra.mxu0 %v767
    %1861 = vmatprep.subr.mxu0 %v760
    %1862 = vmatpush2.xpose.msra.mxu0 %v759
    %1863 = vmatprep.subr.mxu0 %v752
    %1864 = vmatpush2.xpose.msra.mxu0 %v751
    %1865 = vmatprep.subr.mxu0 %v744
    %1866 = vmatpush2.xpose.msra.mxu0 %v743
    %1867 = vmatprep.subr.mxu0 %v736
    %1868 = vmatpush2.xpose.msra.mxu0 %v735
    %1869 = vmatprep.subr.mxu0 %v728
    %1870 = vmatpush2.xpose.msra.mxu0 %v727
    %1871 = vmatprep.subr.mxu0 %v720
    %1872 = vmatpush2.xpose.msra.mxu0 %v719
    %1873 = vmatprep.mubr.f32.mxu0 %v72
    %1874 = vmatmul.mubr.f32.gmra.mxu0 %v71
    %v1875 = vpop.f32.mrf.mxu0
    %v1876 = vadd.f32 %v1805, %v1875
    %v1877 = vpop.f32.mrf.mxu0
    %v1878 = vadd.f32 %v1807, %v1877
    %1879 = vdwg.mxu0
    %1880 = vmatprep.subr.mxu0 %v714
    %1881 = vmatpush1.xpose.msra.mxu0 %v713
    %1882 = vmatprep.subr.mxu0 %v706
    %1883 = vmatpush1.xpose.msra.mxu0 %v705
    %1884 = vmatprep.subr.mxu0 %v698
    %1885 = vmatpush1.xpose.msra.mxu0 %v697
    %1886 = vmatprep.subr.mxu0 %v690
    %1887 = vmatpush1.xpose.msra.mxu0 %v689
    %1888 = vmatprep.subr.mxu0 %v682
    %1889 = vmatpush1.xpose.msra.mxu0 %v681
    %1890 = vmatprep.subr.mxu0 %v674
    %1891 = vmatpush1.xpose.msra.mxu0 %v673
    %1892 = vmatprep.subr.mxu0 %v666
    %1893 = vmatpush1.xpose.msra.mxu0 %v665
    %1894 = vmatprep.subr.mxu0 %v658
    %1895 = vmatpush1.xpose.msra.mxu0 %v657
    %1896 = vmatprep.subr.mxu0 %v650
    %1897 = vmatpush1.xpose.msra.mxu0 %v649
    %1898 = vmatprep.subr.mxu0 %v642
    %1899 = vmatpush1.xpose.msra.mxu0 %v641
    %1900 = vmatprep.subr.mxu0 %v634
    %1901 = vmatpush1.xpose.msra.mxu0 %v633
    %1902 = vmatprep.subr.mxu0 %v626
    %1903 = vmatpush1.xpose.msra.mxu0 %v625
    %1904 = vmatprep.subr.mxu0 %v618
    %1905 = vmatpush1.xpose.msra.mxu0 %v617
    %1906 = vmatprep.subr.mxu0 %v610
    %1907 = vmatpush1.xpose.msra.mxu0 %v609
    %1908 = vmatprep.subr.mxu0 %v602
    %1909 = vmatpush1.xpose.msra.mxu0 %v601
    %1910 = vmatprep.subr.mxu0 %v594
    %1911 = vmatpush1.xpose.msra.mxu0 %v593
    %1912 = vmatprep.subr.mxu0 %v842
    %1913 = vmatpush2.xpose.msra.mxu0 %v841
    %1914 = vmatprep.subr.mxu0 %v834
    %1915 = vmatpush2.xpose.msra.mxu0 %v833
    %1916 = vmatprep.subr.mxu0 %v826
    %1917 = vmatpush2.xpose.msra.mxu0 %v825
    %1918 = vmatprep.subr.mxu0 %v818
    %1919 = vmatpush2.xpose.msra.mxu0 %v817
    %1920 = vmatprep.subr.mxu0 %v810
    %1921 = vmatpush2.xpose.msra.mxu0 %v809
    %1922 = vmatprep.subr.mxu0 %v802
    %1923 = vmatpush2.xpose.msra.mxu0 %v801
    %1924 = vmatprep.subr.mxu0 %v794
    %1925 = vmatpush2.xpose.msra.mxu0 %v793
    %1926 = vmatprep.subr.mxu0 %v786
    %1927 = vmatpush2.xpose.msra.mxu0 %v785
    %1928 = vmatprep.subr.mxu0 %v778
    %1929 = vmatpush2.xpose.msra.mxu0 %v777
    %1930 = vmatprep.subr.mxu0 %v770
    %1931 = vmatpush2.xpose.msra.mxu0 %v769
    %1932 = vmatprep.subr.mxu0 %v762
    %1933 = vmatpush2.xpose.msra.mxu0 %v761
    %1934 = vmatprep.subr.mxu0 %v754
    %1935 = vmatpush2.xpose.msra.mxu0 %v753
    %1936 = vmatprep.subr.mxu0 %v746
    %1937 = vmatpush2.xpose.msra.mxu0 %v745
    %1938 = vmatprep.subr.mxu0 %v738
    %1939 = vmatpush2.xpose.msra.mxu0 %v737
    %1940 = vmatprep.subr.mxu0 %v730
    %1941 = vmatpush2.xpose.msra.mxu0 %v729
    %1942 = vmatprep.subr.mxu0 %v722
    %1943 = vmatpush2.xpose.msra.mxu0 %v721
    %1944 = vmatprep.mubr.f32.mxu0 %v74
    %1945 = vmatmul.mubr.f32.gmra.mxu0 %v73
    %v1946 = vpop.f32.mrf.mxu0
    %v1947 = vadd.f32 %v1876, %v1946
    %v1948 = vpop.f32.mrf.mxu0
    %v1949 = vadd.f32 %v1878, %v1948
    %1950 = vdwg.mxu0
    %1951 = vmatprep.subr.mxu0 %v964
    %1952 = vmatpush1.xpose.msra.mxu0 %v963
    %1953 = vmatprep.subr.mxu0 %v956
    %1954 = vmatpush1.xpose.msra.mxu0 %v955
    %1955 = vmatprep.subr.mxu0 %v948
    %1956 = vmatpush1.xpose.msra.mxu0 %v947
    %1957 = vmatprep.subr.mxu0 %v940
    %1958 = vmatpush1.xpose.msra.mxu0 %v939
    %1959 = vmatprep.subr.mxu0 %v932
    %1960 = vmatpush1.xpose.msra.mxu0 %v931
    %1961 = vmatprep.subr.mxu0 %v924
    %1962 = vmatpush1.xpose.msra.mxu0 %v923
    %1963 = vmatprep.subr.mxu0 %v916
    %1964 = vmatpush1.xpose.msra.mxu0 %v915
    %1965 = vmatprep.subr.mxu0 %v908
    %1966 = vmatpush1.xpose.msra.mxu0 %v907
    %1967 = vmatprep.subr.mxu0 %v900
    %1968 = vmatpush1.xpose.msra.mxu0 %v899
    %1969 = vmatprep.subr.mxu0 %v892
    %1970 = vmatpush1.xpose.msra.mxu0 %v891
    %1971 = vmatprep.subr.mxu0 %v884
    %1972 = vmatpush1.xpose.msra.mxu0 %v883
    %1973 = vmatprep.subr.mxu0 %v876
    %1974 = vmatpush1.xpose.msra.mxu0 %v875
    %1975 = vmatprep.subr.mxu0 %v868
    %1976 = vmatpush1.xpose.msra.mxu0 %v867
    %1977 = vmatprep.subr.mxu0 %v860
    %1978 = vmatpush1.xpose.msra.mxu0 %v859
    %1979 = vmatprep.subr.mxu0 %v852
    %1980 = vmatpush1.xpose.msra.mxu0 %v851
    %1981 = vmatprep.subr.mxu0 %v844
    %1982 = vmatpush1.xpose.msra.mxu0 %v843
    %1983 = vmatprep.subr.mxu0 %v1092
    %1984 = vmatpush2.xpose.msra.mxu0 %v1091
    %1985 = vmatprep.subr.mxu0 %v1084
    %1986 = vmatpush2.xpose.msra.mxu0 %v1083
    %1987 = vmatprep.subr.mxu0 %v1076
    %1988 = vmatpush2.xpose.msra.mxu0 %v1075
    %1989 = vmatprep.subr.mxu0 %v1068
    %1990 = vmatpush2.xpose.msra.mxu0 %v1067
    %1991 = vmatprep.subr.mxu0 %v1060
    %1992 = vmatpush2.xpose.msra.mxu0 %v1059
    %1993 = vmatprep.subr.mxu0 %v1052
    %1994 = vmatpush2.xpose.msra.mxu0 %v1051
    %1995 = vmatprep.subr.mxu0 %v1044
    %1996 = vmatpush2.xpose.msra.mxu0 %v1043
    %1997 = vmatprep.subr.mxu0 %v1036
    %1998 = vmatpush2.xpose.msra.mxu0 %v1035
    %1999 = vmatprep.subr.mxu0 %v1028
    %2000 = vmatpush2.xpose.msra.mxu0 %v1027
    %2001 = vmatprep.subr.mxu0 %v1020
    %2002 = vmatpush2.xpose.msra.mxu0 %v1019
    %2003 = vmatprep.subr.mxu0 %v1012
    %2004 = vmatpush2.xpose.msra.mxu0 %v1011
    %2005 = vmatprep.subr.mxu0 %v1004
    %2006 = vmatpush2.xpose.msra.mxu0 %v1003
    %2007 = vmatprep.subr.mxu0 %v996
    %2008 = vmatpush2.xpose.msra.mxu0 %v995
    %2009 = vmatprep.subr.mxu0 %v988
    %2010 = vmatpush2.xpose.msra.mxu0 %v987
    %2011 = vmatprep.subr.mxu0 %v980
    %2012 = vmatpush2.xpose.msra.mxu0 %v979
    %2013 = vmatprep.subr.mxu0 %v972
    %2014 = vmatpush2.xpose.msra.mxu0 %v971
    %2015 = vmatprep.mubr.f32.mxu0 %v68
    %2016 = vmatmul.mubr.f32.gmra.mxu0 %v67
    %v2017 = vpop.f32.mrf.mxu0
    %v2018 = vadd.f32 0.0, %v2017
    %v2019 = vpop.f32.mrf.mxu0
    %v2020 = vadd.f32 0.0, %v2019
    %2021 = vdwg.mxu0
    %2022 = vmatprep.subr.mxu0 %v966
    %2023 = vmatpush1.xpose.msra.mxu0 %v965
    %2024 = vmatprep.subr.mxu0 %v958
    %2025 = vmatpush1.xpose.msra.mxu0 %v957
    %2026 = vmatprep.subr.mxu0 %v950
    %2027 = vmatpush1.xpose.msra.mxu0 %v949
    %2028 = vmatprep.subr.mxu0 %v942
    %2029 = vmatpush1.xpose.msra.mxu0 %v941
    %2030 = vmatprep.subr.mxu0 %v934
    %2031 = vmatpush1.xpose.msra.mxu0 %v933
    %2032 = vmatprep.subr.mxu0 %v926
    %2033 = vmatpush1.xpose.msra.mxu0 %v925
    %2034 = vmatprep.subr.mxu0 %v918
    %2035 = vmatpush1.xpose.msra.mxu0 %v917
    %2036 = vmatprep.subr.mxu0 %v910
    %2037 = vmatpush1.xpose.msra.mxu0 %v909
    %2038 = vmatprep.subr.mxu0 %v902
    %2039 = vmatpush1.xpose.msra.mxu0 %v901
    %2040 = vmatprep.subr.mxu0 %v894
    %2041 = vmatpush1.xpose.msra.mxu0 %v893
    %2042 = vmatprep.subr.mxu0 %v886
    %2043 = vmatpush1.xpose.msra.mxu0 %v885
    %2044 = vmatprep.subr.mxu0 %v878
    %2045 = vmatpush1.xpose.msra.mxu0 %v877
    %2046 = vmatprep.subr.mxu0 %v870
    %2047 = vmatpush1.xpose.msra.mxu0 %v869
    %2048 = vmatprep.subr.mxu0 %v862
    %2049 = vmatpush1.xpose.msra.mxu0 %v861
    %2050 = vmatprep.subr.mxu0 %v854
    %2051 = vmatpush1.xpose.msra.mxu0 %v853
    %2052 = vmatprep.subr.mxu0 %v846
    %2053 = vmatpush1.xpose.msra.mxu0 %v845
    %2054 = vmatprep.subr.mxu0 %v1094
    %2055 = vmatpush2.xpose.msra.mxu0 %v1093
    %2056 = vmatprep.subr.mxu0 %v1086
    %2057 = vmatpush2.xpose.msra.mxu0 %v1085
    %2058 = vmatprep.subr.mxu0 %v1078
    %2059 = vmatpush2.xpose.msra.mxu0 %v1077
    %2060 = vmatprep.subr.mxu0 %v1070
    %2061 = vmatpush2.xpose.msra.mxu0 %v1069
    %2062 = vmatprep.subr.mxu0 %v1062
    %2063 = vmatpush2.xpose.msra.mxu0 %v1061
    %2064 = vmatprep.subr.mxu0 %v1054
    %2065 = vmatpush2.xpose.msra.mxu0 %v1053
    %2066 = vmatprep.subr.mxu0 %v1046
    %2067 = vmatpush2.xpose.msra.mxu0 %v1045
    %2068 = vmatprep.subr.mxu0 %v1038
    %2069 = vmatpush2.xpose.msra.mxu0 %v1037
    %2070 = vmatprep.subr.mxu0 %v1030
    %2071 = vmatpush2.xpose.msra.mxu0 %v1029
    %2072 = vmatprep.subr.mxu0 %v1022
    %2073 = vmatpush2.xpose.msra.mxu0 %v1021
    %2074 = vmatprep.subr.mxu0 %v1014
    %2075 = vmatpush2.xpose.msra.mxu0 %v1013
    %2076 = vmatprep.subr.mxu0 %v1006
    %2077 = vmatpush2.xpose.msra.mxu0 %v1005
    %2078 = vmatprep.subr.mxu0 %v998
    %2079 = vmatpush2.xpose.msra.mxu0 %v997
    %2080 = vmatprep.subr.mxu0 %v990
    %2081 = vmatpush2.xpose.msra.mxu0 %v989
    %2082 = vmatprep.subr.mxu0 %v982
    %2083 = vmatpush2.xpose.msra.mxu0 %v981
    %2084 = vmatprep.subr.mxu0 %v974
    %2085 = vmatpush2.xpose.msra.mxu0 %v973
    %2086 = vmatprep.mubr.f32.mxu0 %v70
    %2087 = vmatmul.mubr.f32.gmra.mxu0 %v69
    %v2088 = vpop.f32.mrf.mxu0
    %v2089 = vadd.f32 %v2018, %v2088
    %v2090 = vpop.f32.mrf.mxu0
    %v2091 = vadd.f32 %v2020, %v2090
    %2092 = vdwg.mxu0
    %2093 = vmatprep.subr.mxu0 %v968
    %2094 = vmatpush1.xpose.msra.mxu0 %v967
    %2095 = vmatprep.subr.mxu0 %v960
    %2096 = vmatpush1.xpose.msra.mxu0 %v959
    %2097 = vmatprep.subr.mxu0 %v952
    %2098 = vmatpush1.xpose.msra.mxu0 %v951
    %2099 = vmatprep.subr.mxu0 %v944
    %2100 = vmatpush1.xpose.msra.mxu0 %v943
    %2101 = vmatprep.subr.mxu0 %v936
    %2102 = vmatpush1.xpose.msra.mxu0 %v935
    %2103 = vmatprep.subr.mxu0 %v928
    %2104 = vmatpush1.xpose.msra.mxu0 %v927
    %2105 = vmatprep.subr.mxu0 %v920
    %2106 = vmatpush1.xpose.msra.mxu0 %v919
    %2107 = vmatprep.subr.mxu0 %v912
    %2108 = vmatpush1.xpose.msra.mxu0 %v911
    %2109 = vmatprep.subr.mxu0 %v904
    %2110 = vmatpush1.xpose.msra.mxu0 %v903
    %2111 = vmatprep.subr.mxu0 %v896
    %2112 = vmatpush1.xpose.msra.mxu0 %v895
    %2113 = vmatprep.subr.mxu0 %v888
    %2114 = vmatpush1.xpose.msra.mxu0 %v887
    %2115 = vmatprep.subr.mxu0 %v880
    %2116 = vmatpush1.xpose.msra.mxu0 %v879
    %2117 = vmatprep.subr.mxu0 %v872
    %2118 = vmatpush1.xpose.msra.mxu0 %v871
    %2119 = vmatprep.subr.mxu0 %v864
    %2120 = vmatpush1.xpose.msra.mxu0 %v863
    %2121 = vmatprep.subr.mxu0 %v856
    %2122 = vmatpush1.xpose.msra.mxu0 %v855
    %2123 = vmatprep.subr.mxu0 %v848
    %2124 = vmatpush1.xpose.msra.mxu0 %v847
    %2125 = vmatprep.subr.mxu0 %v1096
    %2126 = vmatpush2.xpose.msra.mxu0 %v1095
    %2127 = vmatprep.subr.mxu0 %v1088
    %2128 = vmatpush2.xpose.msra.mxu0 %v1087
    %2129 = vmatprep.subr.mxu0 %v1080
    %2130 = vmatpush2.xpose.msra.mxu0 %v1079
    %2131 = vmatprep.subr.mxu0 %v1072
    %2132 = vmatpush2.xpose.msra.mxu0 %v1071
    %2133 = vmatprep.subr.mxu0 %v1064
    %2134 = vmatpush2.xpose.msra.mxu0 %v1063
    %2135 = vmatprep.subr.mxu0 %v1056
    %2136 = vmatpush2.xpose.msra.mxu0 %v1055
    %2137 = vmatprep.subr.mxu0 %v1048
    %2138 = vmatpush2.xpose.msra.mxu0 %v1047
    %2139 = vmatprep.subr.mxu0 %v1040
    %2140 = vmatpush2.xpose.msra.mxu0 %v1039
    %2141 = vmatprep.subr.mxu0 %v1032
    %2142 = vmatpush2.xpose.msra.mxu0 %v1031
    %2143 = vmatprep.subr.mxu0 %v1024
    %2144 = vmatpush2.xpose.msra.mxu0 %v1023
    %2145 = vmatprep.subr.mxu0 %v1016
    %2146 = vmatpush2.xpose.msra.mxu0 %v1015
    %2147 = vmatprep.subr.mxu0 %v1008
    %2148 = vmatpush2.xpose.msra.mxu0 %v1007
    %2149 = vmatprep.subr.mxu0 %v1000
    %2150 = vmatpush2.xpose.msra.mxu0 %v999
    %2151 = vmatprep.subr.mxu0 %v992
    %2152 = vmatpush2.xpose.msra.mxu0 %v991
    %2153 = vmatprep.subr.mxu0 %v984
    %2154 = vmatpush2.xpose.msra.mxu0 %v983
    %2155 = vmatprep.subr.mxu0 %v976
    %2156 = vmatpush2.xpose.msra.mxu0 %v975
    %2157 = vmatprep.mubr.f32.mxu0 %v72
    %2158 = vmatmul.mubr.f32.gmra.mxu0 %v71
    %v2159 = vpop.f32.mrf.mxu0
    %v2160 = vadd.f32 %v2089, %v2159
    %v2161 = vpop.f32.mrf.mxu0
    %v2162 = vadd.f32 %v2091, %v2161
    %2163 = vdwg.mxu0
    %2164 = vmatprep.subr.mxu0 %v970
    %2165 = vmatpush1.xpose.msra.mxu0 %v969
    %2166 = vmatprep.subr.mxu0 %v962
    %2167 = vmatpush1.xpose.msra.mxu0 %v961
    %2168 = vmatprep.subr.mxu0 %v954
    %2169 = vmatpush1.xpose.msra.mxu0 %v953
    %2170 = vmatprep.subr.mxu0 %v946
    %2171 = vmatpush1.xpose.msra.mxu0 %v945
    %2172 = vmatprep.subr.mxu0 %v938
    %2173 = vmatpush1.xpose.msra.mxu0 %v937
    %2174 = vmatprep.subr.mxu0 %v930
    %2175 = vmatpush1.xpose.msra.mxu0 %v929
    %2176 = vmatprep.subr.mxu0 %v922
    %2177 = vmatpush1.xpose.msra.mxu0 %v921
    %2178 = vmatprep.subr.mxu0 %v914
    %2179 = vmatpush1.xpose.msra.mxu0 %v913
    %2180 = vmatprep.subr.mxu0 %v906
    %2181 = vmatpush1.xpose.msra.mxu0 %v905
    %2182 = vmatprep.subr.mxu0 %v898
    %2183 = vmatpush1.xpose.msra.mxu0 %v897
    %2184 = vmatprep.subr.mxu0 %v890
    %2185 = vmatpush1.xpose.msra.mxu0 %v889
    %2186 = vmatprep.subr.mxu0 %v882
    %2187 = vmatpush1.xpose.msra.mxu0 %v881
    %2188 = vmatprep.subr.mxu0 %v874
    %2189 = vmatpush1.xpose.msra.mxu0 %v873
    %2190 = vmatprep.subr.mxu0 %v866
    %2191 = vmatpush1.xpose.msra.mxu0 %v865
    %2192 = vmatprep.subr.mxu0 %v858
    %2193 = vmatpush1.xpose.msra.mxu0 %v857
    %2194 = vmatprep.subr.mxu0 %v850
    %2195 = vmatpush1.xpose.msra.mxu0 %v849
    %2196 = vmatprep.subr.mxu0 %v1098
    %2197 = vmatpush2.xpose.msra.mxu0 %v1097
    %2198 = vmatprep.subr.mxu0 %v1090
    %2199 = vmatpush2.xpose.msra.mxu0 %v1089
    %2200 = vmatprep.subr.mxu0 %v1082
    %2201 = vmatpush2.xpose.msra.mxu0 %v1081
    %2202 = vmatprep.subr.mxu0 %v1074
    %2203 = vmatpush2.xpose.msra.mxu0 %v1073
    %2204 = vmatprep.subr.mxu0 %v1066
    %2205 = vmatpush2.xpose.msra.mxu0 %v1065
    %2206 = vmatprep.subr.mxu0 %v1058
    %2207 = vmatpush2.xpose.msra.mxu0 %v1057
    %2208 = vmatprep.subr.mxu0 %v1050
    %2209 = vmatpush2.xpose.msra.mxu0 %v1049
    %2210 = vmatprep.subr.mxu0 %v1042
    %2211 = vmatpush2.xpose.msra.mxu0 %v1041
    %2212 = vmatprep.subr.mxu0 %v1034
    %2213 = vmatpush2.xpose.msra.mxu0 %v1033
    %2214 = vmatprep.subr.mxu0 %v1026
    %2215 = vmatpush2.xpose.msra.mxu0 %v1025
    %2216 = vmatprep.subr.mxu0 %v1018
    %2217 = vmatpush2.xpose.msra.mxu0 %v1017
    %2218 = vmatprep.subr.mxu0 %v1010
    %2219 = vmatpush2.xpose.msra.mxu0 %v1009
    %2220 = vmatprep.subr.mxu0 %v1002
    %2221 = vmatpush2.xpose.msra.mxu0 %v1001
    %2222 = vmatprep.subr.mxu0 %v994
    %2223 = vmatpush2.xpose.msra.mxu0 %v993
    %2224 = vmatprep.subr.mxu0 %v986
    %2225 = vmatpush2.xpose.msra.mxu0 %v985
    %2226 = vmatprep.subr.mxu0 %v978
    %2227 = vmatpush2.xpose.msra.mxu0 %v977
    %2228 = vmatprep.mubr.f32.mxu0 %v74
    %2229 = vmatmul.mubr.f32.gmra.mxu0 %v73
    %v2230 = vpop.f32.mrf.mxu0
    %v2231 = vadd.f32 %v2160, %v2230
    %v2232 = vpop.f32.mrf.mxu0
    %v2233 = vadd.f32 %v2162, %v2232
    %2234 = vdwg.mxu0
    %v2235 = vadd.f32 %v1379, %v1381
    %v2236 = vadd.f32 %v2235, %v1663
    %v2237 = vadd.f32 %v2236, %v1665
    %v2238 = vadd.f32 %v2237, %v1947
    %v2239 = vadd.f32 %v2238, %v1949
    %v2240 = vadd.f32 %v2239, %v2231
    %v2241 = vadd.f32 %v2240, %v2233
    %2242 = vadd.xlane.f32.xlu0 %v2241
    %v2243 = vpop.xlane.xlu0 %2242
    %v2244 = vrcp.pop 1024.0
    %v2245 = vmul.f32 %v2243, %v2244
    %v2246 = vsub.f32 %v1379, %v2245
    %v2247 = vsub.f32 %v1381, %v2245
    %v2248 = vsub.f32 %v1663, %v2245
    %v2249 = vsub.f32 %v1665, %v2245
    %v2250 = vsub.f32 %v1947, %v2245
    %v2251 = vsub.f32 %v1949, %v2245
    %v2252 = vsub.f32 %v2231, %v2245
    %v2253 = vsub.f32 %v2233, %v2245
    %v2254 = vmul.f32 %v2246, %v2246
    %v2255 = vmul.f32 %v2247, %v2247
    %v2256 = vmul.f32 %v2248, %v2248
    %v2257 = vmul.f32 %v2249, %v2249
    %v2258 = vmul.f32 %v2250, %v2250
    %v2259 = vmul.f32 %v2251, %v2251
    %v2260 = vmul.f32 %v2252, %v2252
    %v2261 = vmul.f32 %v2253, %v2253
    %v2262 = vadd.f32 %v2254, %v2255
    %v2263 = vadd.f32 %v2262, %v2256
    %v2264 = vadd.f32 %v2263, %v2257
    %v2265 = vadd.f32 %v2264, %v2258
    %v2266 = vadd.f32 %v2265, %v2259
    %v2267 = vadd.f32 %v2266, %v2260
    %v2268 = vadd.f32 %v2267, %v2261
    %2269 = vadd.xlane.f32.xlu0 %v2268
    %v2270 = vpop.xlane.xlu0 %2269
    %v2271 = vmul.f32 %v2270, %v2244
    %v2272 = vadd.f32 %v2271, 1e-12
    %v2273 = vrsqrt.pop %v2272
    %v2274 = vmul.f32 %v2246, %v2273
    %v2275 = vmul.f32 %v2247, %v2273
    %v2276 = vmul.f32 %v2248, %v2273
    %v2277 = vmul.f32 %v2249, %v2273
    %v2278 = vmul.f32 %v2250, %v2273
    %v2279 = vmul.f32 %v2251, %v2273
    %v2280 = vmul.f32 %v2252, %v2273
    %v2281 = vmul.f32 %v2253, %v2273
    %v2282 = vld [vmem:[#allocation7] sm:$0xff]
    %v2284 = vlaneseq
    %v2285 = vshrl.u32 %v2284, 7
    %v2286 = vsub.s32 0, %v2285
    %v2287 = vrot.slane %v2282, %v2286
    %v2288 = vlaneseq
    %v2289 = vshrl.u32 %v2288, 7
    %v2290 = vsub.s32 1, %v2289
    %v2291 = vrot.slane %v2282, %v2290
    %v2292 = vlaneseq
    %v2293 = vshrl.u32 %v2292, 7
    %v2294 = vsub.s32 2, %v2293
    %v2295 = vrot.slane %v2282, %v2294
    %v2296 = vlaneseq
    %v2297 = vshrl.u32 %v2296, 7
    %v2298 = vsub.s32 3, %v2297
    %v2299 = vrot.slane %v2282, %v2298
    %v2300 = vlaneseq
    %v2301 = vshrl.u32 %v2300, 7
    %v2302 = vsub.s32 4, %v2301
    %v2303 = vrot.slane %v2282, %v2302
    %v2304 = vlaneseq
    %v2305 = vshrl.u32 %v2304, 7
    %v2306 = vsub.s32 5, %v2305
    %v2307 = vrot.slane %v2282, %v2306
    %v2308 = vlaneseq
    %v2309 = vshrl.u32 %v2308, 7
    %v2310 = vsub.s32 6, %v2309
    %v2311 = vrot.slane %v2282, %v2310
    %v2312 = vlaneseq
    %v2313 = vshrl.u32 %v2312, 7
    %v2314 = vsub.s32 7, %v2313
    %v2315 = vrot.slane %v2282, %v2314
    %v2324 = vmul.f32 %v2274, %v2287
    %v2325 = vmul.f32 %v2275, %v2291
    %v2326 = vmul.f32 %v2276, %v2295
    %v2327 = vmul.f32 %v2277, %v2299
    %v2328 = vmul.f32 %v2278, %v2303
    %v2329 = vmul.f32 %v2279, %v2307
    %v2330 = vmul.f32 %v2280, %v2311
    %v2331 = vmul.f32 %v2281, %v2315
    %v2332 = vld [vmem:[#allocation8] sm:$0xff]
    %v2334 = vlaneseq
    %v2335 = vshrl.u32 %v2334, 7
    %v2336 = vsub.s32 0, %v2335
    %v2337 = vrot.slane %v2332, %v2336
    %v2338 = vlaneseq
    %v2339 = vshrl.u32 %v2338, 7
    %v2340 = vsub.s32 1, %v2339
    %v2341 = vrot.slane %v2332, %v2340
    %v2342 = vlaneseq
    %v2343 = vshrl.u32 %v2342, 7
    %v2344 = vsub.s32 2, %v2343
    %v2345 = vrot.slane %v2332, %v2344
    %v2346 = vlaneseq
    %v2347 = vshrl.u32 %v2346, 7
    %v2348 = vsub.s32 3, %v2347
    %v2349 = vrot.slane %v2332, %v2348
    %v2350 = vlaneseq
    %v2351 = vshrl.u32 %v2350, 7
    %v2352 = vsub.s32 4, %v2351
    %v2353 = vrot.slane %v2332, %v2352
    %v2354 = vlaneseq
    %v2355 = vshrl.u32 %v2354, 7
    %v2356 = vsub.s32 5, %v2355
    %v2357 = vrot.slane %v2332, %v2356
    %v2358 = vlaneseq
    %v2359 = vshrl.u32 %v2358, 7
    %v2360 = vsub.s32 6, %v2359
    %v2361 = vrot.slane %v2332, %v2360
    %v2362 = vlaneseq
    %v2363 = vshrl.u32 %v2362, 7
    %v2364 = vsub.s32 7, %v2363
    %v2365 = vrot.slane %v2332, %v2364
    %v2374 = vadd.f32 %v2324, %v2337
    %v2375 = vadd.f32 %v2325, %v2341
    %v2376 = vadd.f32 %v2326, %v2345
    %v2377 = vadd.f32 %v2327, %v2349
    %v2378 = vadd.f32 %v2328, %v2353
    %v2379 = vadd.f32 %v2329, %v2357
    %v2380 = vadd.f32 %v2330, %v2361
    %v2381 = vadd.f32 %v2331, %v2365
    %v2382 = vtanh.pop %v2374
    %v2383 = vtanh.pop %v2375
    %v2384 = vtanh.pop %v2376
    %v2385 = vtanh.pop %v2377
    %v2386 = vtanh.pop %v2378
    %v2387 = vtanh.pop %v2379
    %v2388 = vtanh.pop %v2380
    %v2389 = vtanh.pop %v2381
    %2390 = vst [vmem:[#allocation10] sm:$0xff] %v2382
    %2391 = vst [vmem:[#allocation10 + $0x8] sm:$0xff] %v2383
    %2392 = vst [vmem:[#allocation10 + $0x10] sm:$0xff] %v2384
    %2393 = vst [vmem:[#allocation10 + $0x18] sm:$0xff] %v2385
    %2394 = vst [vmem:[#allocation10 + $0x20] sm:$0xff] %v2386
    %2395 = vst [vmem:[#allocation10 + $0x28] sm:$0xff] %v2387
    %2396 = vst [vmem:[#allocation10 + $0x30] sm:$0xff] %v2388
    %2397 = vst [vmem:[#allocation10 + $0x38] sm:$0xff] %v2389
    // Predicated region
    $region34: #{tpu_custom_call.1} parent=1 // pred_check
      _
    $region35: #{tpu_custom_call.1} parent=1 // pred_check_branch
      %2399 = sbr.rel (0) target = $region37
    $region36: #{tpu_custom_call.1} parent=1 // pred_region
      %s2401 = ssub.s32 1024, 1024
      %2402 = vsyncadd [#allocation4], %s2401
      %s2404 = sshll.u32 [#allocation10], 4
      %s2405 = int_to_ptr.vmem [resolvable:$true] %s2404
      %2407 = dma.vmem_to_hbm [thread:$0]  %s2405, 1024, %s4, [#allocation4]
    $region37: #{tpu_custom_call.1} parent=1 // pred_fallthru
      _
    // Predicated region
    $region38: #{tpu_custom_call.1} parent=1 // pred_check
      _
    $region39: #{tpu_custom_call.1} parent=1 // pred_check_branch
      %2409 = sbr.rel (0) target = $region41
    $region40: #{tpu_custom_call.1} parent=1 // pred_region
      %2410 = dma.done [#allocation4], 1024
    $region41: #{tpu_custom_call.1} parent=1 // pred_fallthru
      _
    %2411 = vsyncpa [#allocation3], 1
    %2412 = vsyncpa [#allocation6], 1
    %2413 = vsyncpa [#allocation9], 1
    %2414 = vsyncpa [#allocation4], 1

</llo_original>
